<compile_context>
chip_gen: v6e
topology: v6e:2x2x1
jax: 0.10.0
libtpu: 0.0.40
codegen_flags: <defaults>
</compile_context>

<pallas_src>
import functools
import math

import jax
import jax.numpy as jnp
from jax import lax
from jax.experimental import pallas as pl
from jax.experimental.pallas import tpu as pltpu


def _round_up(x, m):
    return ((x + m - 1) // m) * m


def _input_proj_kernel(x_ref, wih_ref, b_ref, gx_ref):
    """gates_x = x @ W_ih^T + (b_ih + b_hh), tiled over rows = time*batch."""
    gx_ref[...] = (jnp.dot(x_ref[...], wih_ref[...],
                           preferred_element_type=jnp.float32)
                   + b_ref[...]).astype(gx_ref.dtype)


def _lstm_recurrence_kernel(gx_ref, whh_ref, h0_ref, c0_ref, lens_ref,
                            y_ref, hN_ref, cN_ref, h_sc, c_sc):
    """TT LSTM steps per grid iteration. Grid axis 0 = time blocks (serial)."""
    blk = pl.program_id(0)
    tt = gx_ref.shape[0]          # static block size
    H = h_sc.shape[-1]

    @pl.when(blk == 0)
    def _init():
        h_sc[...] = h0_ref[...].astype(jnp.float32)
        c_sc[...] = c0_ref[...].astype(jnp.float32)

    whh = whh_ref[...]            # (H, 4H); constant block index -> resident
    lens = lens_ref[...]          # (B, 1) int32
    t0 = blk * tt

    def step(k, carry):
        h, c = carry
        gates = gx_ref[k].astype(jnp.float32) + jnp.dot(
            h, whh, preferred_element_type=jnp.float32)          # (B, 4H)
        i = jax.nn.sigmoid(gates[:, 0:H])
        f = jax.nn.sigmoid(gates[:, H:2 * H])
        g = jnp.tanh(gates[:, 2 * H:3 * H])
        o = jax.nn.sigmoid(gates[:, 3 * H:4 * H])
        c_new = f * c + i * g
        h_new = o * jnp.tanh(c_new)
        # Packed-sequence semantics: rows past their length freeze their state
        # and emit zeros (pad_packed_sequence pads with 0).
        valid = (t0 + k) < lens                                    # (B, 1) bool
        c_u = jnp.where(valid, c_new, c)
        h_u = jnp.where(valid, h_new, h)
        y_ref[k] = jnp.where(valid, h_new, 0.0).astype(y_ref.dtype)
        return (h_u, c_u)

    h_fin, c_fin = lax.fori_loop(0, tt, step, (h_sc[...], c_sc[...]),
                                 unroll=True)
    h_sc[...] = h_fin
    c_sc[...] = c_fin

    @pl.when(blk == pl.num_programs(0) - 1)
    def _finalize():
        hN_ref[...] = h_fin.astype(hN_ref.dtype)
        cN_ref[...] = c_fin.astype(cN_ref.dtype)


@functools.partial(jax.jit, static_argnames=("tt", "vmem_limit_bytes"))
def _lstm_layer(x_tm, w_ih_t, w_hh_t, b, h0, c0, lens2d, *, tt,
                vmem_limit_bytes=None):
    """One LSTM layer over a padded time-major input.

    x_tm: (T_pad, B_pad, Din) with T_pad % tt == 0 and B_pad % 8 == 0.
    Returns y_tm (T_pad, B_pad, H), h_N (B_pad, H), c_N (B_pad, H)."""
    T_pad, B_pad, Din = x_tm.shape
    H = h0.shape[-1]
    G = 4 * H
    n_blk = T_pad // tt
    rm = tt * B_pad

    # ---- input projection: big, fully-parallel matmul over all time steps.
    x2d = x_tm.reshape(T_pad * B_pad, Din)
    gx2d = pl.pallas_call(
        _input_proj_kernel,
        out_shape=jax.ShapeDtypeStruct((T_pad * B_pad, G), jnp.float32),
        grid_spec=pltpu.PrefetchScalarGridSpec(
            num_scalar_prefetch=0,
            grid=(n_blk,),
            in_specs=[pl.BlockSpec((rm, Din), lambda i: (i, 0)),     # x rows
                      pl.BlockSpec((Din, G), lambda i: (0, 0)),      # W_ih^T
                      pl.BlockSpec((1, G), lambda i: (0, 0))],       # bias
            out_specs=pl.BlockSpec((rm, G), lambda i: (i, 0))),
        compiler_params=pltpu.CompilerParams(
            dimension_semantics=("parallel",),
            vmem_limit_bytes=vmem_limit_bytes),
    )(x2d, w_ih_t, b)
    gx = gx2d.reshape(T_pad, B_pad, G)

    # ---- serial recurrence: only h @ W_hh^T stays on the time-critical path.
    y, hN, cN = pl.pallas_call(
        _lstm_recurrence_kernel,
        out_shape=(jax.ShapeDtypeStruct((T_pad, B_pad, H), x_tm.dtype),
                   jax.ShapeDtypeStruct((B_pad, H), x_tm.dtype),
                   jax.ShapeDtypeStruct((B_pad, H), x_tm.dtype)),
        grid_spec=pltpu.PrefetchScalarGridSpec(
            num_scalar_prefetch=0,
            grid=(n_blk,),
            in_specs=[
                pl.BlockSpec((tt, B_pad, G), lambda i: (i, 0, 0)),   # gates_x
                pl.BlockSpec((H, G), lambda i: (0, 0)),              # W_hh^T
                pl.BlockSpec((B_pad, H), lambda i: (0, 0)),          # h0
                pl.BlockSpec((B_pad, H), lambda i: (0, 0)),          # c0
                pl.BlockSpec((B_pad, 1), lambda i: (0, 0)),          # lens
            ],
            out_specs=(
                pl.BlockSpec((tt, B_pad, H), lambda i: (i, 0, 0)),   # outputs
                pl.BlockSpec((B_pad, H), lambda i: (0, 0)),          # h_N
                pl.BlockSpec((B_pad, H), lambda i: (0, 0)),          # c_N
            ),
            scratch_shapes=[pltpu.VMEM((B_pad, H), jnp.float32),
                            pltpu.VMEM((B_pad, H), jnp.float32)]),
        compiler_params=pltpu.CompilerParams(
            dimension_semantics=("arbitrary",),     # time is recurrent
            vmem_limit_bytes=vmem_limit_bytes),
    )(gx, w_hh_t, h0, c0, lens2d)
    return y, hN, cN


class RNNEncoderPallas:
    """Pallas implementation of RNNEncoder with rnn_type='LSTM'."""

    def __init__(self, rnn_type, input_size, hidden_size, layer_num,
                 dropout, bidirectional, key, time_block=16,
                 vmem_limit_bytes=None):
        assert rnn_type == "LSTM", "only LSTM implemented"
        # TODO(synk): bidirectional variant (reverse-time pass + concat) not implemented.
        assert not bidirectional
        # dropout only applies between layers in training mode; inference path has none.
        self.rnn_type = rnn_type
        self.input_size = input_size
        self.hidden_size = hidden_size
        self.layer_num = layer_num
        self.bidirectional = bidirectional
        self.time_block = time_block                  # TT steps per grid block
        # Knob for production sizes (v5e: 16 MiB / v7x: 32 MiB default scoped
        # VMEM); leave None for the small demo shapes.
        self.vmem_limit_bytes = vmem_limit_bytes

        k = 1.0 / math.sqrt(hidden_size)
        self.params = []
        for l in range(layer_num):
            din = input_size if l == 0 else hidden_size
            key, k1, k2, k3, k4 = jax.random.split(key, 5)
            w_ih = jax.random.uniform(k1, (4 * hidden_size, din),
                                      jnp.float32, -k, k)
            w_hh = jax.random.uniform(k2, (4 * hidden_size, hidden_size),
                                      jnp.float32, -k, k)
            b_ih = jax.random.uniform(k3, (4 * hidden_size,), jnp.float32, -k, k)
            b_hh = jax.random.uniform(k4, (4 * hidden_size,), jnp.float32, -k, k)
            # store pre-transposed weights + fused bias for the kernels
            # TODO(synk): optional bf16 weight storage (halves HBM/VMEM + 2x MXU)
            # would slightly loosen numerical parity with the f32 reference.
            self.params.append((w_ih.T, w_hh.T,
                                (b_ih + b_hh).reshape(1, 4 * hidden_size)))

    def init_hidden(self, batch_size):
        shape = (self.layer_num, batch_size, self.hidden_size)
        return (jnp.zeros(shape, jnp.float32), jnp.zeros(shape, jnp.float32))

    def forward(self, seq_emb, seq_len=None, hidden=None, is_sorted=None):
        B, T, _ = seq_emb.shape
        if hidden is None:
            hidden = self.init_hidden(B)
        h0_all, c0_all = hidden
        lens = (jnp.full((B,), T, jnp.int32) if seq_len is None
                else seq_len.astype(jnp.int32))

        tt = min(self.time_block, _round_up(T, 8))
        T_pad = _round_up(T, tt)
        B_pad = _round_up(B, 8)

        x = jnp.transpose(seq_emb, (1, 0, 2))          # time-major (T, B, D)
        x = jnp.pad(x, ((0, T_pad - T), (0, B_pad - B), (0, 0)))
        lens2d = jnp.pad(lens, (0, B_pad - B)).reshape(B_pad, 1)
        h0_p = jnp.pad(h0_all, ((0, 0), (0, B_pad - B), (0, 0)))
        c0_p = jnp.pad(c0_all, ((0, 0), (0, B_pad - B), (0, 0)))

        h_fin, c_fin = [], []
        for l in range(self.layer_num):
            w_ih_t, w_hh_t, b = self.params[l]
            # TODO(synk): layers could be fused into one pallas_call to avoid
            # the per-layer HBM round trip of the (T,B,H) activations.
            x, hN, cN = _lstm_layer(x, w_ih_t, w_hh_t, b, h0_p[l], c0_p[l],
                                    lens2d, tt=tt,
                                    vmem_limit_bytes=self.vmem_limit_bytes)
            h_fin.append(hN[:B])
            c_fin.append(cN[:B])
        output = jnp.transpose(x[:T, :B], (1, 0, 2))   # batch-first [B, T, H]
        return output, (jnp.stack(h_fin, 0), jnp.stack(c_fin, 0))

    # pure-JAX reference (lax.scan) used only for correctness checking
    def reference(self, seq_emb, seq_len=None, hidden=None):
        B, T, _ = seq_emb.shape
        H = self.hidden_size
        if hidden is None:
            hidden = self.init_hidden(B)
        h0_all, c0_all = hidden
        lens = (jnp.full((B,), T, jnp.int32) if seq_len is None
                else seq_len.astype(jnp.int32))
        x = jnp.transpose(seq_emb, (1, 0, 2))
        ts = jnp.arange(T, dtype=jnp.int32)
        h_fin, c_fin = [], []
        for l in range(self.layer_num):
            w_ih_t, w_hh_t, b = self.params[l]

            def step(carry, inp, w_ih_t=w_ih_t, w_hh_t=w_hh_t, b=b):
                h, c = carry
                x_t, t = inp
                gates = x_t @ w_ih_t + h @ w_hh_t + b
                i = jax.nn.sigmoid(gates[:, 0:H])
                f = jax.nn.sigmoid(gates[:, H:2 * H])
                g = jnp.tanh(gates[:, 2 * H:3 * H])
                o = jax.nn.sigmoid(gates[:, 3 * H:4 * H])
                c_new = f * c + i * g
                h_new = o * jnp.tanh(c_new)
                valid = (t < lens)[:, None].astype(x_t.dtype)
                c_u = valid * c_new + (1.0 - valid) * c
                h_u = valid * h_new + (1.0 - valid) * h
                return (h_u, c_u), valid * h_new

            (hN, cN), ys = lax.scan(step, (h0_all[l], c0_all[l]), (x, ts))
            x = ys
            h_fin.append(hN)
            c_fin.append(cN)
        return (jnp.transpose(x, (1, 0, 2)),
                (jnp.stack(h_fin, 0), jnp.stack(c_fin, 0)))


if __name__ == "__main__":
    B, T, D, H, L = 4, 8, 32, 32, 2
    enc = RNNEncoderPallas("LSTM", input_size=D, hidden_size=H, layer_num=L,
                           dropout=0.0, bidirectional=False,
                           key=jax.random.PRNGKey(0))

    kx, _ = jax.random.split(jax.random.PRNGKey(0))
    seq_emb = jax.random.normal(kx, (B, T, D), jnp.float32)
    seq_len = jnp.array([8, 5, 8, 3], dtype=jnp.int32)   # unsorted lengths

    # path 1: no seq_len (plain self.rnn(seq_emb, hidden))
    out1, (h1, c1) = enc.forward(seq_emb)
    # path 2: seq_len provided (packed / masked semantics)
    out2, (h2, c2) = enc.forward(seq_emb, seq_len=seq_len)
    jax.block_until_ready((out1, h1, c1, out2, h2, c2))

    ref1 = enc.reference(seq_emb)
    ref2 = enc.reference(seq_emb, seq_len=seq_len)

    for got, ref in ((out1, ref1[0]), (h1, ref1[1][0]), (c1, ref1[1][1]),
                     (out2, ref2[0]), (h2, ref2[1][0]), (c2, ref2[1][1])):
        assert jnp.allclose(got, ref, rtol=2e-3, atol=2e-3), \
            float(jnp.max(jnp.abs(got - ref)))

    print("KERNEL_OK")
</pallas_src>

<mosaic_0001>
module attributes {stable_mosaic.version = 11 : i64} {
  func.func @_input_proj_kernel(%arg0: i32, %arg1: memref<64x32xf32, #tpu.memory_space<vmem>>, %arg2: memref<32x128xf32, #tpu.memory_space<vmem>>, %arg3: memref<1x128xf32, #tpu.memory_space<vmem>>, %arg4: memref<64x128xf32, #tpu.memory_space<vmem>>) attributes {dimension_semantics = [#tpu.dimension_semantics<parallel>], iteration_bounds = array<i64: 1>, scalar_prefetch = 0 : i64, scratch_operands = 0 : i64, tpu.core_type = #tpu.core_type<tc>, window_params = [{transform_indices = @transform_0, window_bounds = array<i64: 64, 32>}, {pipeline_mode = #tpu.pipeline_mode<synchronous>, transform_indices = @transform_1, window_bounds = array<i64: 32, 128>}, {pipeline_mode = #tpu.pipeline_mode<synchronous>, transform_indices = @transform_2, window_bounds = array<i64: 1, 128>}, {transform_indices = @transform_3, window_bounds = array<i64: 64, 128>}]} {
    %c0 = arith.constant 0 : index
    %c0_0 = arith.constant 0 : index
    %0 = vector.load %arg1[%c0, %c0_0] : memref<64x32xf32, #tpu.memory_space<vmem>>, vector<64x32xf32>
    %c0_1 = arith.constant 0 : index
    %c0_2 = arith.constant 0 : index
    %1 = vector.load %arg2[%c0_1, %c0_2] : memref<32x128xf32, #tpu.memory_space<vmem>>, vector<32x128xf32>
    %cst = arith.constant dense<0.000000e+00> : vector<64x128xf32>
    %2 = tpu.matmul %0, %1, %cst {dimension_numbers = #tpu.dot_dimension_numbers<[1], [0], [0], [1], [0, 0, 1, 1], [], []>} : vector<64x32xf32>, vector<32x128xf32>, vector<64x128xf32> -> vector<64x128xf32>
    %c0_3 = arith.constant 0 : index
    %c0_4 = arith.constant 0 : index
    %3 = vector.load %arg3[%c0_3, %c0_4] : memref<1x128xf32, #tpu.memory_space<vmem>>, vector<1x128xf32>
    %4 = vector.broadcast %3 : vector<1x128xf32> to vector<64x128xf32>
    %5 = arith.addf %2, %4 : vector<64x128xf32>
    %c0_5 = arith.constant 0 : index
    %c0_6 = arith.constant 0 : index
    %6 = vector.load %arg4[%c0_5, %c0_6] : memref<64x128xf32, #tpu.memory_space<vmem>>, vector<64x128xf32>
    tpu.vector_store %arg4[%c0_5, %c0_6], %5 {strides = array<i32>} : memref<64x128xf32, #tpu.memory_space<vmem>>, vector<64x128xf32>,
    return
  }
  func.func @transform_0(%arg0: i32) -> (i32, i32) {
    %c0_i32 = arith.constant 0 : i32
    %c0_i32_0 = arith.constant 0 : i32
    return %arg0, %c0_i32 : i32, i32
  }
  func.func @transform_1(%arg0: i32) -> (i32, i32) {
    %c0_i32 = arith.constant 0 : i32
    %c0_i32_0 = arith.constant 0 : i32
    %c0_i32_1 = arith.constant 0 : i32
    return %c0_i32, %c0_i32_0 : i32, i32
  }
  func.func @transform_2(%arg0: i32) -> (i32, i32) {
    %c0_i32 = arith.constant 0 : i32
    %c0_i32_0 = arith.constant 0 : i32
    %c0_i32_1 = arith.constant 0 : i32
    return %c0_i32, %c0_i32_0 : i32, i32
  }
  func.func @transform_3(%arg0: i32) -> (i32, i32) {
    %c0_i32 = arith.constant 0 : i32
    %c0_i32_0 = arith.constant 0 : i32
    return %arg0, %c0_i32 : i32, i32
  }
}

module attributes {stable_mosaic.version = 11 : i64} {
  func.func @_lstm_recurrence_kernel(%arg0: i32, %arg1: memref<8x8x128xf32, #tpu.memory_space<vmem>>, %arg2: memref<32x128xf32, #tpu.memory_space<vmem>>, %arg3: memref<8x32xf32, #tpu.memory_space<vmem>>, %arg4: memref<8x32xf32, #tpu.memory_space<vmem>>, %arg5: memref<8x1xi32, #tpu.memory_space<vmem>>, %arg6: memref<8x8x32xf32, #tpu.memory_space<vmem>>, %arg7: memref<8x32xf32, #tpu.memory_space<vmem>>, %arg8: memref<8x32xf32, #tpu.memory_space<vmem>>, %arg9: memref<8x32xf32, #tpu.memory_space<vmem>>, %arg10: memref<8x32xf32, #tpu.memory_space<vmem>>) attributes {dimension_semantics = [#tpu.dimension_semantics<arbitrary>], iteration_bounds = array<i64: 1>, scalar_prefetch = 0 : i64, scratch_operands = 2 : i64, tpu.core_type = #tpu.core_type<tc>, window_params = [{transform_indices = @transform_0, window_bounds = array<i64: 8, 8, 128>}, {pipeline_mode = #tpu.pipeline_mode<synchronous>, transform_indices = @transform_1, window_bounds = array<i64: 32, 128>}, {pipeline_mode = #tpu.pipeline_mode<synchronous>, transform_indices = @transform_2, window_bounds = array<i64: 8, 32>}, {pipeline_mode = #tpu.pipeline_mode<synchronous>, transform_indices = @transform_3, window_bounds = array<i64: 8, 32>}, {pipeline_mode = #tpu.pipeline_mode<synchronous>, transform_indices = @transform_4, window_bounds = array<i64: 8, 1>}, {transform_indices = @transform_5, window_bounds = array<i64: 8, 8, 32>}, {pipeline_mode = #tpu.pipeline_mode<synchronous>, transform_indices = @transform_6, window_bounds = array<i64: 8, 32>}, {pipeline_mode = #tpu.pipeline_mode<synchronous>, transform_indices = @transform_7, window_bounds = array<i64: 8, 32>}]} {
    %c0_i32 = arith.constant 0 : i32
    %0 = arith.cmpi eq, %arg0, %c0_i32 : i32
    %1 = arith.extui %0 : i1 to i32
    %c0_i32_0 = arith.constant 0 : i32
    %2 = arith.cmpi ne, %1, %c0_i32_0 : i32
    scf.if %2 {
      %c0_87 = arith.constant 0 : index
      %c0_88 = arith.constant 0 : index
      %389 = vector.load %arg3[%c0_87, %c0_88] : memref<8x32xf32, #tpu.memory_space<vmem>>, vector<8x32xf32>
      %c0_89 = arith.constant 0 : index
      %c0_90 = arith.constant 0 : index
      %390 = vector.load %arg9[%c0_89, %c0_90] : memref<8x32xf32, #tpu.memory_space<vmem>>, vector<8x32xf32>
      tpu.vector_store %arg9[%c0_89, %c0_90], %389 {strides = array<i32>} : memref<8x32xf32, #tpu.memory_space<vmem>>, vector<8x32xf32>,
      %c0_91 = arith.constant 0 : index
      %c0_92 = arith.constant 0 : index
      %391 = vector.load %arg4[%c0_91, %c0_92] : memref<8x32xf32, #tpu.memory_space<vmem>>, vector<8x32xf32>
      %c0_93 = arith.constant 0 : index
      %c0_94 = arith.constant 0 : index
      %392 = vector.load %arg10[%c0_93, %c0_94] : memref<8x32xf32, #tpu.memory_space<vmem>>, vector<8x32xf32>
      tpu.vector_store %arg10[%c0_93, %c0_94], %391 {strides = array<i32>} : memref<8x32xf32, #tpu.memory_space<vmem>>, vector<8x32xf32>,
    } else {
    }
    %c0 = arith.constant 0 : index
    %c0_1 = arith.constant 0 : index
    %3 = vector.load %arg2[%c0, %c0_1] : memref<32x128xf32, #tpu.memory_space<vmem>>, vector<32x128xf32>
    %c0_2 = arith.constant 0 : index
    %c0_3 = arith.constant 0 : index
    %4 = vector.load %arg5[%c0_2, %c0_3] : memref<8x1xi32, #tpu.memory_space<vmem>>, vector<8x1xi32>
    %c8_i32 = arith.constant 8 : i32
    %5 = arith.muli %arg0, %c8_i32 : i32
    %c0_4 = arith.constant 0 : index
    %c0_5 = arith.constant 0 : index
    %6 = vector.load %arg9[%c0_4, %c0_5] : memref<8x32xf32, #tpu.memory_space<vmem>>, vector<8x32xf32>
    %c0_6 = arith.constant 0 : index
    %c0_7 = arith.constant 0 : index
    %7 = vector.load %arg10[%c0_6, %c0_7] : memref<8x32xf32, #tpu.memory_space<vmem>>, vector<8x32xf32>
    %c0_i32_8 = arith.constant 0 : i32
    %8 = arith.index_cast %c0_i32_8 : i32 to index
    %c0_9 = arith.constant 0 : index
    %c0_10 = arith.constant 0 : index
    %9 = vector.load %arg1[%8, %c0_9, %c0_10] : memref<8x8x128xf32, #tpu.memory_space<vmem>>, vector<1x8x128xf32>
    %10 = vector.shape_cast %9 : vector<1x8x128xf32> to vector<8x128xf32>
    %cst = arith.constant dense<0.000000e+00> : vector<8x128xf32>
    %11 = tpu.matmul %6, %3, %cst {dimension_numbers = #tpu.dot_dimension_numbers<[1], [0], [0], [1], [0, 0, 1, 1], [], []>} : vector<8x32xf32>, vector<32x128xf32>, vector<8x128xf32> -> vector<8x128xf32>
    %12 = arith.addf %10, %11 : vector<8x128xf32>
    %13 = vector.extract_strided_slice %12 {offsets = [0, 0], sizes = [8, 32], strides = [1, 1]} : vector<8x128xf32> to vector<8x32xf32>
    %14 = arith.negf %13 : vector<8x32xf32>
    %15 = math.exp %14 : vector<8x32xf32>
    %cst_11 = arith.constant 1.000000e+00 : f32
    %16 = vector.broadcast %cst_11 : f32 to vector<8x32xf32>
    %17 = arith.addf %16, %15 : vector<8x32xf32>
    %18 = arith.divf %16, %17 : vector<8x32xf32>
    %19 = vector.extract_strided_slice %12 {offsets = [0, 32], sizes = [8, 32], strides = [1, 1]} : vector<8x128xf32> to vector<8x32xf32>
    %20 = arith.negf %19 : vector<8x32xf32>
    %21 = math.exp %20 : vector<8x32xf32>
    %cst_12 = arith.constant 1.000000e+00 : f32
    %22 = vector.broadcast %cst_12 : f32 to vector<8x32xf32>
    %23 = arith.addf %22, %21 : vector<8x32xf32>
    %24 = arith.divf %22, %23 : vector<8x32xf32>
    %25 = vector.extract_strided_slice %12 {offsets = [0, 64], sizes = [8, 32], strides = [1, 1]} : vector<8x128xf32> to vector<8x32xf32>
    %26 = math.tanh %25 : vector<8x32xf32>
    %27 = vector.extract_strided_slice %12 {offsets = [0, 96], sizes = [8, 32], strides = [1, 1]} : vector<8x128xf32> to vector<8x32xf32>
    %28 = arith.negf %27 : vector<8x32xf32>
    %29 = math.exp %28 : vector<8x32xf32>
    %cst_13 = arith.constant 1.000000e+00 : f32
    %30 = vector.broadcast %cst_13 : f32 to vector<8x32xf32>
    %31 = arith.addf %30, %29 : vector<8x32xf32>
    %32 = arith.divf %30, %31 : vector<8x32xf32>
    %33 = arith.mulf %24, %7 : vector<8x32xf32>
    %34 = arith.mulf %18, %26 : vector<8x32xf32>
    %35 = arith.addf %33, %34 : vector<8x32xf32>
    %36 = math.tanh %35 : vector<8x32xf32>
    %37 = arith.mulf %32, %36 : vector<8x32xf32>
    %38 = arith.addi %5, %c0_i32_8 : i32
    %39 = vector.broadcast %38 : i32 to vector<8x1xi32>
    %40 = arith.cmpi slt, %39, %4 : vector<8x1xi32>
    %41 = vector.shape_cast %40 : vector<8x1xi1> to vector<8x1xi1>
    %42 = vector.broadcast %41 : vector<8x1xi1> to vector<8x32xi1>
    %43 = arith.select %42, %35, %7 : vector<8x32xi1>, vector<8x32xf32>
    %44 = vector.shape_cast %40 : vector<8x1xi1> to vector<8x1xi1>
    %45 = vector.broadcast %44 : vector<8x1xi1> to vector<8x32xi1>
    %46 = arith.select %45, %37, %6 : vector<8x32xi1>, vector<8x32xf32>
    %cst_14 = arith.constant 0.000000e+00 : f32
    %47 = vector.shape_cast %40 : vector<8x1xi1> to vector<8x1xi1>
    %48 = vector.broadcast %47 : vector<8x1xi1> to vector<8x32xi1>
    %49 = vector.broadcast %cst_14 : f32 to vector<8x32xf32>
    %50 = arith.select %48, %37, %49 : vector<8x32xi1>, vector<8x32xf32>
    %51 = arith.index_cast %c0_i32_8 : i32 to index
    %c0_15 = arith.constant 0 : index
    %c0_16 = arith.constant 0 : index
    %52 = vector.load %arg6[%51, %c0_15, %c0_16] : memref<8x8x32xf32, #tpu.memory_space<vmem>>, vector<1x8x32xf32>
    %53 = vector.shape_cast %52 : vector<1x8x32xf32> to vector<8x32xf32>
    %54 = vector.shape_cast %50 : vector<8x32xf32> to vector<1x8x32xf32>
    tpu.vector_store %arg6[%51, %c0_15, %c0_16], %54 {strides = array<i32>} : memref<8x8x32xf32, #tpu.memory_space<vmem>>, vector<1x8x32xf32>,
    %c1_i32 = arith.constant 1 : i32
    %55 = arith.index_cast %c1_i32 : i32 to index
    %c0_17 = arith.constant 0 : index
    %c0_18 = arith.constant 0 : index
    %56 = vector.load %arg1[%55, %c0_17, %c0_18] : memref<8x8x128xf32, #tpu.memory_space<vmem>>, vector<1x8x128xf32>
    %57 = vector.shape_cast %56 : vector<1x8x128xf32> to vector<8x128xf32>
    %cst_19 = arith.constant dense<0.000000e+00> : vector<8x128xf32>
    %58 = tpu.matmul %46, %3, %cst_19 {dimension_numbers = #tpu.dot_dimension_numbers<[1], [0], [0], [1], [0, 0, 1, 1], [], []>} : vector<8x32xf32>, vector<32x128xf32>, vector<8x128xf32> -> vector<8x128xf32>
    %59 = arith.addf %57, %58 : vector<8x128xf32>
    %60 = vector.extract_strided_slice %59 {offsets = [0, 0], sizes = [8, 32], strides = [1, 1]} : vector<8x128xf32> to vector<8x32xf32>
    %61 = arith.negf %60 : vector<8x32xf32>
    %62 = math.exp %61 : vector<8x32xf32>
    %cst_20 = arith.constant 1.000000e+00 : f32
    %63 = vector.broadcast %cst_20 : f32 to vector<8x32xf32>
    %64 = arith.addf %63, %62 : vector<8x32xf32>
    %65 = arith.divf %63, %64 : vector<8x32xf32>
    %66 = vector.extract_strided_slice %59 {offsets = [0, 32], sizes = [8, 32], strides = [1, 1]} : vector<8x128xf32> to vector<8x32xf32>
    %67 = arith.negf %66 : vector<8x32xf32>
    %68 = math.exp %67 : vector<8x32xf32>
    %cst_21 = arith.constant 1.000000e+00 : f32
    %69 = vector.broadcast %cst_21 : f32 to vector<8x32xf32>
    %70 = arith.addf %69, %68 : vector<8x32xf32>
    %71 = arith.divf %69, %70 : vector<8x32xf32>
    %72 = vector.extract_strided_slice %59 {offsets = [0, 64], sizes = [8, 32], strides = [1, 1]} : vector<8x128xf32> to vector<8x32xf32>
    %73 = math.tanh %72 : vector<8x32xf32>
    %74 = vector.extract_strided_slice %59 {offsets = [0, 96], sizes = [8, 32], strides = [1, 1]} : vector<8x128xf32> to vector<8x32xf32>
    %75 = arith.negf %74 : vector<8x32xf32>
    %76 = math.exp %75 : vector<8x32xf32>
    %cst_22 = arith.constant 1.000000e+00 : f32
    %77 = vector.broadcast %cst_22 : f32 to vector<8x32xf32>
    %78 = arith.addf %77, %76 : vector<8x32xf32>
    %79 = arith.divf %77, %78 : vector<8x32xf32>
    %80 = arith.mulf %71, %43 : vector<8x32xf32>
    %81 = arith.mulf %65, %73 : vector<8x32xf32>
    %82 = arith.addf %80, %81 : vector<8x32xf32>
    %83 = math.tanh %82 : vector<8x32xf32>
    %84 = arith.mulf %79, %83 : vector<8x32xf32>
    %85 = arith.addi %5, %c1_i32 : i32
    %86 = vector.broadcast %85 : i32 to vector<8x1xi32>
    %87 = arith.cmpi slt, %86, %4 : vector<8x1xi32>
    %88 = vector.shape_cast %87 : vector<8x1xi1> to vector<8x1xi1>
    %89 = vector.broadcast %88 : vector<8x1xi1> to vector<8x32xi1>
    %90 = arith.select %89, %82, %43 : vector<8x32xi1>, vector<8x32xf32>
    %91 = vector.shape_cast %87 : vector<8x1xi1> to vector<8x1xi1>
    %92 = vector.broadcast %91 : vector<8x1xi1> to vector<8x32xi1>
    %93 = arith.select %92, %84, %46 : vector<8x32xi1>, vector<8x32xf32>
    %cst_23 = arith.constant 0.000000e+00 : f32
    %94 = vector.shape_cast %87 : vector<8x1xi1> to vector<8x1xi1>
    %95 = vector.broadcast %94 : vector<8x1xi1> to vector<8x32xi1>
    %96 = vector.broadcast %cst_23 : f32 to vector<8x32xf32>
    %97 = arith.select %95, %84, %96 : vector<8x32xi1>, vector<8x32xf32>
    %98 = arith.index_cast %c1_i32 : i32 to index
    %c0_24 = arith.constant 0 : index
    %c0_25 = arith.constant 0 : index
    %99 = vector.load %arg6[%98, %c0_24, %c0_25] : memref<8x8x32xf32, #tpu.memory_space<vmem>>, vector<1x8x32xf32>
    %100 = vector.shape_cast %99 : vector<1x8x32xf32> to vector<8x32xf32>
    %101 = vector.shape_cast %97 : vector<8x32xf32> to vector<1x8x32xf32>
    tpu.vector_store %arg6[%98, %c0_24, %c0_25], %101 {strides = array<i32>} : memref<8x8x32xf32, #tpu.memory_space<vmem>>, vector<1x8x32xf32>,
    %c2_i32 = arith.constant 2 : i32
    %102 = arith.index_cast %c2_i32 : i32 to index
    %c0_26 = arith.constant 0 : index
    %c0_27 = arith.constant 0 : index
    %103 = vector.load %arg1[%102, %c0_26, %c0_27] : memref<8x8x128xf32, #tpu.memory_space<vmem>>, vector<1x8x128xf32>
    %104 = vector.shape_cast %103 : vector<1x8x128xf32> to vector<8x128xf32>
    %cst_28 = arith.constant dense<0.000000e+00> : vector<8x128xf32>
    %105 = tpu.matmul %93, %3, %cst_28 {dimension_numbers = #tpu.dot_dimension_numbers<[1], [0], [0], [1], [0, 0, 1, 1], [], []>} : vector<8x32xf32>, vector<32x128xf32>, vector<8x128xf32> -> vector<8x128xf32>
    %106 = arith.addf %104, %105 : vector<8x128xf32>
    %107 = vector.extract_strided_slice %106 {offsets = [0, 0], sizes = [8, 32], strides = [1, 1]} : vector<8x128xf32> to vector<8x32xf32>
    %108 = arith.negf %107 : vector<8x32xf32>
    %109 = math.exp %108 : vector<8x32xf32>
    %cst_29 = arith.constant 1.000000e+00 : f32
    %110 = vector.broadcast %cst_29 : f32 to vector<8x32xf32>
    %111 = arith.addf %110, %109 : vector<8x32xf32>
    %112 = arith.divf %110, %111 : vector<8x32xf32>
    %113 = vector.extract_strided_slice %106 {offsets = [0, 32], sizes = [8, 32], strides = [1, 1]} : vector<8x128xf32> to vector<8x32xf32>
    %114 = arith.negf %113 : vector<8x32xf32>
    %115 = math.exp %114 : vector<8x32xf32>
    %cst_30 = arith.constant 1.000000e+00 : f32
    %116 = vector.broadcast %cst_30 : f32 to vector<8x32xf32>
    %117 = arith.addf %116, %115 : vector<8x32xf32>
    %118 = arith.divf %116, %117 : vector<8x32xf32>
    %119 = vector.extract_strided_slice %106 {offsets = [0, 64], sizes = [8, 32], strides = [1, 1]} : vector<8x128xf32> to vector<8x32xf32>
    %120 = math.tanh %119 : vector<8x32xf32>
    %121 = vector.extract_strided_slice %106 {offsets = [0, 96], sizes = [8, 32], strides = [1, 1]} : vector<8x128xf32> to vector<8x32xf32>
    %122 = arith.negf %121 : vector<8x32xf32>
    %123 = math.exp %122 : vector<8x32xf32>
    %cst_31 = arith.constant 1.000000e+00 : f32
    %124 = vector.broadcast %cst_31 : f32 to vector<8x32xf32>
    %125 = arith.addf %124, %123 : vector<8x32xf32>
    %126 = arith.divf %124, %125 : vector<8x32xf32>
    %127 = arith.mulf %118, %90 : vector<8x32xf32>
    %128 = arith.mulf %112, %120 : vector<8x32xf32>
    %129 = arith.addf %127, %128 : vector<8x32xf32>
    %130 = math.tanh %129 : vector<8x32xf32>
    %131 = arith.mulf %126, %130 : vector<8x32xf32>
    %132 = arith.addi %5, %c2_i32 : i32
    %133 = vector.broadcast %132 : i32 to vector<8x1xi32>
    %134 = arith.cmpi slt, %133, %4 : vector<8x1xi32>
    %135 = vector.shape_cast %134 : vector<8x1xi1> to vector<8x1xi1>
    %136 = vector.broadcast %135 : vector<8x1xi1> to vector<8x32xi1>
    %137 = arith.select %136, %129, %90 : vector<8x32xi1>, vector<8x32xf32>
    %138 = vector.shape_cast %134 : vector<8x1xi1> to vector<8x1xi1>
    %139 = vector.broadcast %138 : vector<8x1xi1> to vector<8x32xi1>
    %140 = arith.select %139, %131, %93 : vector<8x32xi1>, vector<8x32xf32>
    %cst_32 = arith.constant 0.000000e+00 : f32
    %141 = vector.shape_cast %134 : vector<8x1xi1> to vector<8x1xi1>
    %142 = vector.broadcast %141 : vector<8x1xi1> to vector<8x32xi1>
    %143 = vector.broadcast %cst_32 : f32 to vector<8x32xf32>
    %144 = arith.select %142, %131, %143 : vector<8x32xi1>, vector<8x32xf32>
    %145 = arith.index_cast %c2_i32 : i32 to index
    %c0_33 = arith.constant 0 : index
    %c0_34 = arith.constant 0 : index
    %146 = vector.load %arg6[%145, %c0_33, %c0_34] : memref<8x8x32xf32, #tpu.memory_space<vmem>>, vector<1x8x32xf32>
    %147 = vector.shape_cast %146 : vector<1x8x32xf32> to vector<8x32xf32>
    %148 = vector.shape_cast %144 : vector<8x32xf32> to vector<1x8x32xf32>
    tpu.vector_store %arg6[%145, %c0_33, %c0_34], %148 {strides = array<i32>} : memref<8x8x32xf32, #tpu.memory_space<vmem>>, vector<1x8x32xf32>,
    %c3_i32 = arith.constant 3 : i32
    %149 = arith.index_cast %c3_i32 : i32 to index
    %c0_35 = arith.constant 0 : index
    %c0_36 = arith.constant 0 : index
    %150 = vector.load %arg1[%149, %c0_35, %c0_36] : memref<8x8x128xf32, #tpu.memory_space<vmem>>, vector<1x8x128xf32>
    %151 = vector.shape_cast %150 : vector<1x8x128xf32> to vector<8x128xf32>
    %cst_37 = arith.constant dense<0.000000e+00> : vector<8x128xf32>
    %152 = tpu.matmul %140, %3, %cst_37 {dimension_numbers = #tpu.dot_dimension_numbers<[1], [0], [0], [1], [0, 0, 1, 1], [], []>} : vector<8x32xf32>, vector<32x128xf32>, vector<8x128xf32> -> vector<8x128xf32>
    %153 = arith.addf %151, %152 : vector<8x128xf32>
    %154 = vector.extract_strided_slice %153 {offsets = [0, 0], sizes = [8, 32], strides = [1, 1]} : vector<8x128xf32> to vector<8x32xf32>
    %155 = arith.negf %154 : vector<8x32xf32>
    %156 = math.exp %155 : vector<8x32xf32>
    %cst_38 = arith.constant 1.000000e+00 : f32
    %157 = vector.broadcast %cst_38 : f32 to vector<8x32xf32>
    %158 = arith.addf %157, %156 : vector<8x32xf32>
    %159 = arith.divf %157, %158 : vector<8x32xf32>
    %160 = vector.extract_strided_slice %153 {offsets = [0, 32], sizes = [8, 32], strides = [1, 1]} : vector<8x128xf32> to vector<8x32xf32>
    %161 = arith.negf %160 : vector<8x32xf32>
    %162 = math.exp %161 : vector<8x32xf32>
    %cst_39 = arith.constant 1.000000e+00 : f32
    %163 = vector.broadcast %cst_39 : f32 to vector<8x32xf32>
    %164 = arith.addf %163, %162 : vector<8x32xf32>
    %165 = arith.divf %163, %164 : vector<8x32xf32>
    %166 = vector.extract_strided_slice %153 {offsets = [0, 64], sizes = [8, 32], strides = [1, 1]} : vector<8x128xf32> to vector<8x32xf32>
    %167 = math.tanh %166 : vector<8x32xf32>
    %168 = vector.extract_strided_slice %153 {offsets = [0, 96], sizes = [8, 32], strides = [1, 1]} : vector<8x128xf32> to vector<8x32xf32>
    %169 = arith.negf %168 : vector<8x32xf32>
    %170 = math.exp %169 : vector<8x32xf32>
    %cst_40 = arith.constant 1.000000e+00 : f32
    %171 = vector.broadcast %cst_40 : f32 to vector<8x32xf32>
    %172 = arith.addf %171, %170 : vector<8x32xf32>
    %173 = arith.divf %171, %172 : vector<8x32xf32>
    %174 = arith.mulf %165, %137 : vector<8x32xf32>
    %175 = arith.mulf %159, %167 : vector<8x32xf32>
    %176 = arith.addf %174, %175 : vector<8x32xf32>
    %177 = math.tanh %176 : vector<8x32xf32>
    %178 = arith.mulf %173, %177 : vector<8x32xf32>
    %179 = arith.addi %5, %c3_i32 : i32
    %180 = vector.broadcast %179 : i32 to vector<8x1xi32>
    %181 = arith.cmpi slt, %180, %4 : vector<8x1xi32>
    %182 = vector.shape_cast %181 : vector<8x1xi1> to vector<8x1xi1>
    %183 = vector.broadcast %182 : vector<8x1xi1> to vector<8x32xi1>
    %184 = arith.select %183, %176, %137 : vector<8x32xi1>, vector<8x32xf32>
    %185 = vector.shape_cast %181 : vector<8x1xi1> to vector<8x1xi1>
    %186 = vector.broadcast %185 : vector<8x1xi1> to vector<8x32xi1>
    %187 = arith.select %186, %178, %140 : vector<8x32xi1>, vector<8x32xf32>
    %cst_41 = arith.constant 0.000000e+00 : f32
    %188 = vector.shape_cast %181 : vector<8x1xi1> to vector<8x1xi1>
    %189 = vector.broadcast %188 : vector<8x1xi1> to vector<8x32xi1>
    %190 = vector.broadcast %cst_41 : f32 to vector<8x32xf32>
    %191 = arith.select %189, %178, %190 : vector<8x32xi1>, vector<8x32xf32>
    %192 = arith.index_cast %c3_i32 : i32 to index
    %c0_42 = arith.constant 0 : index
    %c0_43 = arith.constant 0 : index
    %193 = vector.load %arg6[%192, %c0_42, %c0_43] : memref<8x8x32xf32, #tpu.memory_space<vmem>>, vector<1x8x32xf32>
    %194 = vector.shape_cast %193 : vector<1x8x32xf32> to vector<8x32xf32>
    %195 = vector.shape_cast %191 : vector<8x32xf32> to vector<1x8x32xf32>
    tpu.vector_store %arg6[%192, %c0_42, %c0_43], %195 {strides = array<i32>} : memref<8x8x32xf32, #tpu.memory_space<vmem>>, vector<1x8x32xf32>,
    %c4_i32 = arith.constant 4 : i32
    %196 = arith.index_cast %c4_i32 : i32 to index
    %c0_44 = arith.constant 0 : index
    %c0_45 = arith.constant 0 : index
    %197 = vector.load %arg1[%196, %c0_44, %c0_45] : memref<8x8x128xf32, #tpu.memory_space<vmem>>, vector<1x8x128xf32>
    %198 = vector.shape_cast %197 : vector<1x8x128xf32> to vector<8x128xf32>
    %cst_46 = arith.constant dense<0.000000e+00> : vector<8x128xf32>
    %199 = tpu.matmul %187, %3, %cst_46 {dimension_numbers = #tpu.dot_dimension_numbers<[1], [0], [0], [1], [0, 0, 1, 1], [], []>} : vector<8x32xf32>, vector<32x128xf32>, vector<8x128xf32> -> vector<8x128xf32>
    %200 = arith.addf %198, %199 : vector<8x128xf32>
    %201 = vector.extract_strided_slice %200 {offsets = [0, 0], sizes = [8, 32], strides = [1, 1]} : vector<8x128xf32> to vector<8x32xf32>
    %202 = arith.negf %201 : vector<8x32xf32>
    %203 = math.exp %202 : vector<8x32xf32>
    %cst_47 = arith.constant 1.000000e+00 : f32
    %204 = vector.broadcast %cst_47 : f32 to vector<8x32xf32>
    %205 = arith.addf %204, %203 : vector<8x32xf32>
    %206 = arith.divf %204, %205 : vector<8x32xf32>
    %207 = vector.extract_strided_slice %200 {offsets = [0, 32], sizes = [8, 32], strides = [1, 1]} : vector<8x128xf32> to vector<8x32xf32>
    %208 = arith.negf %207 : vector<8x32xf32>
    %209 = math.exp %208 : vector<8x32xf32>
    %cst_48 = arith.constant 1.000000e+00 : f32
    %210 = vector.broadcast %cst_48 : f32 to vector<8x32xf32>
    %211 = arith.addf %210, %209 : vector<8x32xf32>
    %212 = arith.divf %210, %211 : vector<8x32xf32>
    %213 = vector.extract_strided_slice %200 {offsets = [0, 64], sizes = [8, 32], strides = [1, 1]} : vector<8x128xf32> to vector<8x32xf32>
    %214 = math.tanh %213 : vector<8x32xf32>
    %215 = vector.extract_strided_slice %200 {offsets = [0, 96], sizes = [8, 32], strides = [1, 1]} : vector<8x128xf32> to vector<8x32xf32>
    %216 = arith.negf %215 : vector<8x32xf32>
    %217 = math.exp %216 : vector<8x32xf32>
    %cst_49 = arith.constant 1.000000e+00 : f32
    %218 = vector.broadcast %cst_49 : f32 to vector<8x32xf32>
    %219 = arith.addf %218, %217 : vector<8x32xf32>
    %220 = arith.divf %218, %219 : vector<8x32xf32>
    %221 = arith.mulf %212, %184 : vector<8x32xf32>
    %222 = arith.mulf %206, %214 : vector<8x32xf32>
    %223 = arith.addf %221, %222 : vector<8x32xf32>
    %224 = math.tanh %223 : vector<8x32xf32>
    %225 = arith.mulf %220, %224 : vector<8x32xf32>
    %226 = arith.addi %5, %c4_i32 : i32
    %227 = vector.broadcast %226 : i32 to vector<8x1xi32>
    %228 = arith.cmpi slt, %227, %4 : vector<8x1xi32>
    %229 = vector.shape_cast %228 : vector<8x1xi1> to vector<8x1xi1>
    %230 = vector.broadcast %229 : vector<8x1xi1> to vector<8x32xi1>
    %231 = arith.select %230, %223, %184 : vector<8x32xi1>, vector<8x32xf32>
    %232 = vector.shape_cast %228 : vector<8x1xi1> to vector<8x1xi1>
    %233 = vector.broadcast %232 : vector<8x1xi1> to vector<8x32xi1>
    %234 = arith.select %233, %225, %187 : vector<8x32xi1>, vector<8x32xf32>
    %cst_50 = arith.constant 0.000000e+00 : f32
    %235 = vector.shape_cast %228 : vector<8x1xi1> to vector<8x1xi1>
    %236 = vector.broadcast %235 : vector<8x1xi1> to vector<8x32xi1>
    %237 = vector.broadcast %cst_50 : f32 to vector<8x32xf32>
    %238 = arith.select %236, %225, %237 : vector<8x32xi1>, vector<8x32xf32>
    %239 = arith.index_cast %c4_i32 : i32 to index
    %c0_51 = arith.constant 0 : index
    %c0_52 = arith.constant 0 : index
    %240 = vector.load %arg6[%239, %c0_51, %c0_52] : memref<8x8x32xf32, #tpu.memory_space<vmem>>, vector<1x8x32xf32>
    %241 = vector.shape_cast %240 : vector<1x8x32xf32> to vector<8x32xf32>
    %242 = vector.shape_cast %238 : vector<8x32xf32> to vector<1x8x32xf32>
    tpu.vector_store %arg6[%239, %c0_51, %c0_52], %242 {strides = array<i32>} : memref<8x8x32xf32, #tpu.memory_space<vmem>>, vector<1x8x32xf32>,
    %c5_i32 = arith.constant 5 : i32
    %243 = arith.index_cast %c5_i32 : i32 to index
    %c0_53 = arith.constant 0 : index
    %c0_54 = arith.constant 0 : index
    %244 = vector.load %arg1[%243, %c0_53, %c0_54] : memref<8x8x128xf32, #tpu.memory_space<vmem>>, vector<1x8x128xf32>
    %245 = vector.shape_cast %244 : vector<1x8x128xf32> to vector<8x128xf32>
    %cst_55 = arith.constant dense<0.000000e+00> : vector<8x128xf32>
    %246 = tpu.matmul %234, %3, %cst_55 {dimension_numbers = #tpu.dot_dimension_numbers<[1], [0], [0], [1], [0, 0, 1, 1], [], []>} : vector<8x32xf32>, vector<32x128xf32>, vector<8x128xf32> -> vector<8x128xf32>
    %247 = arith.addf %245, %246 : vector<8x128xf32>
    %248 = vector.extract_strided_slice %247 {offsets = [0, 0], sizes = [8, 32], strides = [1, 1]} : vector<8x128xf32> to vector<8x32xf32>
    %249 = arith.negf %248 : vector<8x32xf32>
    %250 = math.exp %249 : vector<8x32xf32>
    %cst_56 = arith.constant 1.000000e+00 : f32
    %251 = vector.broadcast %cst_56 : f32 to vector<8x32xf32>
    %252 = arith.addf %251, %250 : vector<8x32xf32>
    %253 = arith.divf %251, %252 : vector<8x32xf32>
    %254 = vector.extract_strided_slice %247 {offsets = [0, 32], sizes = [8, 32], strides = [1, 1]} : vector<8x128xf32> to vector<8x32xf32>
    %255 = arith.negf %254 : vector<8x32xf32>
    %256 = math.exp %255 : vector<8x32xf32>
    %cst_57 = arith.constant 1.000000e+00 : f32
    %257 = vector.broadcast %cst_57 : f32 to vector<8x32xf32>
    %258 = arith.addf %257, %256 : vector<8x32xf32>
    %259 = arith.divf %257, %258 : vector<8x32xf32>
    %260 = vector.extract_strided_slice %247 {offsets = [0, 64], sizes = [8, 32], strides = [1, 1]} : vector<8x128xf32> to vector<8x32xf32>
    %261 = math.tanh %260 : vector<8x32xf32>
    %262 = vector.extract_strided_slice %247 {offsets = [0, 96], sizes = [8, 32], strides = [1, 1]} : vector<8x128xf32> to vector<8x32xf32>
    %263 = arith.negf %262 : vector<8x32xf32>
    %264 = math.exp %263 : vector<8x32xf32>
    %cst_58 = arith.constant 1.000000e+00 : f32
    %265 = vector.broadcast %cst_58 : f32 to vector<8x32xf32>
    %266 = arith.addf %265, %264 : vector<8x32xf32>
    %267 = arith.divf %265, %266 : vector<8x32xf32>
    %268 = arith.mulf %259, %231 : vector<8x32xf32>
    %269 = arith.mulf %253, %261 : vector<8x32xf32>
    %270 = arith.addf %268, %269 : vector<8x32xf32>
    %271 = math.tanh %270 : vector<8x32xf32>
    %272 = arith.mulf %267, %271 : vector<8x32xf32>
    %273 = arith.addi %5, %c5_i32 : i32
    %274 = vector.broadcast %273 : i32 to vector<8x1xi32>
    %275 = arith.cmpi slt, %274, %4 : vector<8x1xi32>
    %276 = vector.shape_cast %275 : vector<8x1xi1> to vector<8x1xi1>
    %277 = vector.broadcast %276 : vector<8x1xi1> to vector<8x32xi1>
    %278 = arith.select %277, %270, %231 : vector<8x32xi1>, vector<8x32xf32>
    %279 = vector.shape_cast %275 : vector<8x1xi1> to vector<8x1xi1>
    %280 = vector.broadcast %279 : vector<8x1xi1> to vector<8x32xi1>
    %281 = arith.select %280, %272, %234 : vector<8x32xi1>, vector<8x32xf32>
    %cst_59 = arith.constant 0.000000e+00 : f32
    %282 = vector.shape_cast %275 : vector<8x1xi1> to vector<8x1xi1>
    %283 = vector.broadcast %282 : vector<8x1xi1> to vector<8x32xi1>
    %284 = vector.broadcast %cst_59 : f32 to vector<8x32xf32>
    %285 = arith.select %283, %272, %284 : vector<8x32xi1>, vector<8x32xf32>
    %286 = arith.index_cast %c5_i32 : i32 to index
    %c0_60 = arith.constant 0 : index
    %c0_61 = arith.constant 0 : index
    %287 = vector.load %arg6[%286, %c0_60, %c0_61] : memref<8x8x32xf32, #tpu.memory_space<vmem>>, vector<1x8x32xf32>
    %288 = vector.shape_cast %287 : vector<1x8x32xf32> to vector<8x32xf32>
    %289 = vector.shape_cast %285 : vector<8x32xf32> to vector<1x8x32xf32>
    tpu.vector_store %arg6[%286, %c0_60, %c0_61], %289 {strides = array<i32>} : memref<8x8x32xf32, #tpu.memory_space<vmem>>, vector<1x8x32xf32>,
    %c6_i32 = arith.constant 6 : i32
    %290 = arith.index_cast %c6_i32 : i32 to index
    %c0_62 = arith.constant 0 : index
    %c0_63 = arith.constant 0 : index
    %291 = vector.load %arg1[%290, %c0_62, %c0_63] : memref<8x8x128xf32, #tpu.memory_space<vmem>>, vector<1x8x128xf32>
    %292 = vector.shape_cast %291 : vector<1x8x128xf32> to vector<8x128xf32>
    %cst_64 = arith.constant dense<0.000000e+00> : vector<8x128xf32>
    %293 = tpu.matmul %281, %3, %cst_64 {dimension_numbers = #tpu.dot_dimension_numbers<[1], [0], [0], [1], [0, 0, 1, 1], [], []>} : vector<8x32xf32>, vector<32x128xf32>, vector<8x128xf32> -> vector<8x128xf32>
    %294 = arith.addf %292, %293 : vector<8x128xf32>
    %295 = vector.extract_strided_slice %294 {offsets = [0, 0], sizes = [8, 32], strides = [1, 1]} : vector<8x128xf32> to vector<8x32xf32>
    %296 = arith.negf %295 : vector<8x32xf32>
    %297 = math.exp %296 : vector<8x32xf32>
    %cst_65 = arith.constant 1.000000e+00 : f32
    %298 = vector.broadcast %cst_65 : f32 to vector<8x32xf32>
    %299 = arith.addf %298, %297 : vector<8x32xf32>
    %300 = arith.divf %298, %299 : vector<8x32xf32>
    %301 = vector.extract_strided_slice %294 {offsets = [0, 32], sizes = [8, 32], strides = [1, 1]} : vector<8x128xf32> to vector<8x32xf32>
    %302 = arith.negf %301 : vector<8x32xf32>
    %303 = math.exp %302 : vector<8x32xf32>
    %cst_66 = arith.constant 1.000000e+00 : f32
    %304 = vector.broadcast %cst_66 : f32 to vector<8x32xf32>
    %305 = arith.addf %304, %303 : vector<8x32xf32>
    %306 = arith.divf %304, %305 : vector<8x32xf32>
    %307 = vector.extract_strided_slice %294 {offsets = [0, 64], sizes = [8, 32], strides = [1, 1]} : vector<8x128xf32> to vector<8x32xf32>
    %308 = math.tanh %307 : vector<8x32xf32>
    %309 = vector.extract_strided_slice %294 {offsets = [0, 96], sizes = [8, 32], strides = [1, 1]} : vector<8x128xf32> to vector<8x32xf32>
    %310 = arith.negf %309 : vector<8x32xf32>
    %311 = math.exp %310 : vector<8x32xf32>
    %cst_67 = arith.constant 1.000000e+00 : f32
    %312 = vector.broadcast %cst_67 : f32 to vector<8x32xf32>
    %313 = arith.addf %312, %311 : vector<8x32xf32>
    %314 = arith.divf %312, %313 : vector<8x32xf32>
    %315 = arith.mulf %306, %278 : vector<8x32xf32>
    %316 = arith.mulf %300, %308 : vector<8x32xf32>
    %317 = arith.addf %315, %316 : vector<8x32xf32>
    %318 = math.tanh %317 : vector<8x32xf32>
    %319 = arith.mulf %314, %318 : vector<8x32xf32>
    %320 = arith.addi %5, %c6_i32 : i32
    %321 = vector.broadcast %320 : i32 to vector<8x1xi32>
    %322 = arith.cmpi slt, %321, %4 : vector<8x1xi32>
    %323 = vector.shape_cast %322 : vector<8x1xi1> to vector<8x1xi1>
    %324 = vector.broadcast %323 : vector<8x1xi1> to vector<8x32xi1>
    %325 = arith.select %324, %317, %278 : vector<8x32xi1>, vector<8x32xf32>
    %326 = vector.shape_cast %322 : vector<8x1xi1> to vector<8x1xi1>
    %327 = vector.broadcast %326 : vector<8x1xi1> to vector<8x32xi1>
    %328 = arith.select %327, %319, %281 : vector<8x32xi1>, vector<8x32xf32>
    %cst_68 = arith.constant 0.000000e+00 : f32
    %329 = vector.shape_cast %322 : vector<8x1xi1> to vector<8x1xi1>
    %330 = vector.broadcast %329 : vector<8x1xi1> to vector<8x32xi1>
    %331 = vector.broadcast %cst_68 : f32 to vector<8x32xf32>
    %332 = arith.select %330, %319, %331 : vector<8x32xi1>, vector<8x32xf32>
    %333 = arith.index_cast %c6_i32 : i32 to index
    %c0_69 = arith.constant 0 : index
    %c0_70 = arith.constant 0 : index
    %334 = vector.load %arg6[%333, %c0_69, %c0_70] : memref<8x8x32xf32, #tpu.memory_space<vmem>>, vector<1x8x32xf32>
    %335 = vector.shape_cast %334 : vector<1x8x32xf32> to vector<8x32xf32>
    %336 = vector.shape_cast %332 : vector<8x32xf32> to vector<1x8x32xf32>
    tpu.vector_store %arg6[%333, %c0_69, %c0_70], %336 {strides = array<i32>} : memref<8x8x32xf32, #tpu.memory_space<vmem>>, vector<1x8x32xf32>,
    %c7_i32 = arith.constant 7 : i32
    %337 = arith.index_cast %c7_i32 : i32 to index
    %c0_71 = arith.constant 0 : index
    %c0_72 = arith.constant 0 : index
    %338 = vector.load %arg1[%337, %c0_71, %c0_72] : memref<8x8x128xf32, #tpu.memory_space<vmem>>, vector<1x8x128xf32>
    %339 = vector.shape_cast %338 : vector<1x8x128xf32> to vector<8x128xf32>
    %cst_73 = arith.constant dense<0.000000e+00> : vector<8x128xf32>
    %340 = tpu.matmul %328, %3, %cst_73 {dimension_numbers = #tpu.dot_dimension_numbers<[1], [0], [0], [1], [0, 0, 1, 1], [], []>} : vector<8x32xf32>, vector<32x128xf32>, vector<8x128xf32> -> vector<8x128xf32>
    %341 = arith.addf %339, %340 : vector<8x128xf32>
    %342 = vector.extract_strided_slice %341 {offsets = [0, 0], sizes = [8, 32], strides = [1, 1]} : vector<8x128xf32> to vector<8x32xf32>
    %343 = arith.negf %342 : vector<8x32xf32>
    %344 = math.exp %343 : vector<8x32xf32>
    %cst_74 = arith.constant 1.000000e+00 : f32
    %345 = vector.broadcast %cst_74 : f32 to vector<8x32xf32>
    %346 = arith.addf %345, %344 : vector<8x32xf32>
    %347 = arith.divf %345, %346 : vector<8x32xf32>
    %348 = vector.extract_strided_slice %341 {offsets = [0, 32], sizes = [8, 32], strides = [1, 1]} : vector<8x128xf32> to vector<8x32xf32>
    %349 = arith.negf %348 : vector<8x32xf32>
    %350 = math.exp %349 : vector<8x32xf32>
    %cst_75 = arith.constant 1.000000e+00 : f32
    %351 = vector.broadcast %cst_75 : f32 to vector<8x32xf32>
    %352 = arith.addf %351, %350 : vector<8x32xf32>
    %353 = arith.divf %351, %352 : vector<8x32xf32>
    %354 = vector.extract_strided_slice %341 {offsets = [0, 64], sizes = [8, 32], strides = [1, 1]} : vector<8x128xf32> to vector<8x32xf32>
    %355 = math.tanh %354 : vector<8x32xf32>
    %356 = vector.extract_strided_slice %341 {offsets = [0, 96], sizes = [8, 32], strides = [1, 1]} : vector<8x128xf32> to vector<8x32xf32>
    %357 = arith.negf %356 : vector<8x32xf32>
    %358 = math.exp %357 : vector<8x32xf32>
    %cst_76 = arith.constant 1.000000e+00 : f32
    %359 = vector.broadcast %cst_76 : f32 to vector<8x32xf32>
    %360 = arith.addf %359, %358 : vector<8x32xf32>
    %361 = arith.divf %359, %360 : vector<8x32xf32>
    %362 = arith.mulf %353, %325 : vector<8x32xf32>
    %363 = arith.mulf %347, %355 : vector<8x32xf32>
    %364 = arith.addf %362, %363 : vector<8x32xf32>
    %365 = math.tanh %364 : vector<8x32xf32>
    %366 = arith.mulf %361, %365 : vector<8x32xf32>
    %367 = arith.addi %5, %c7_i32 : i32
    %368 = vector.broadcast %367 : i32 to vector<8x1xi32>
    %369 = arith.cmpi slt, %368, %4 : vector<8x1xi32>
    %370 = vector.shape_cast %369 : vector<8x1xi1> to vector<8x1xi1>
    %371 = vector.broadcast %370 : vector<8x1xi1> to vector<8x32xi1>
    %372 = arith.select %371, %364, %325 : vector<8x32xi1>, vector<8x32xf32>
    %373 = vector.shape_cast %369 : vector<8x1xi1> to vector<8x1xi1>
    %374 = vector.broadcast %373 : vector<8x1xi1> to vector<8x32xi1>
    %375 = arith.select %374, %366, %328 : vector<8x32xi1>, vector<8x32xf32>
    %cst_77 = arith.constant 0.000000e+00 : f32
    %376 = vector.shape_cast %369 : vector<8x1xi1> to vector<8x1xi1>
    %377 = vector.broadcast %376 : vector<8x1xi1> to vector<8x32xi1>
    %378 = vector.broadcast %cst_77 : f32 to vector<8x32xf32>
    %379 = arith.select %377, %366, %378 : vector<8x32xi1>, vector<8x32xf32>
    %380 = arith.index_cast %c7_i32 : i32 to index
    %c0_78 = arith.constant 0 : index
    %c0_79 = arith.constant 0 : index
    %381 = vector.load %arg6[%380, %c0_78, %c0_79] : memref<8x8x32xf32, #tpu.memory_space<vmem>>, vector<1x8x32xf32>
    %382 = vector.shape_cast %381 : vector<1x8x32xf32> to vector<8x32xf32>
    %383 = vector.shape_cast %379 : vector<8x32xf32> to vector<1x8x32xf32>
    tpu.vector_store %arg6[%380, %c0_78, %c0_79], %383 {strides = array<i32>} : memref<8x8x32xf32, #tpu.memory_space<vmem>>, vector<1x8x32xf32>,
    %c8_i32_80 = arith.constant 8 : i32
    %c0_81 = arith.constant 0 : index
    %c0_82 = arith.constant 0 : index
    %384 = vector.load %arg9[%c0_81, %c0_82] : memref<8x32xf32, #tpu.memory_space<vmem>>, vector<8x32xf32>
    tpu.vector_store %arg9[%c0_81, %c0_82], %375 {strides = array<i32>} : memref<8x32xf32, #tpu.memory_space<vmem>>, vector<8x32xf32>,
    %c0_83 = arith.constant 0 : index
    %c0_84 = arith.constant 0 : index
    %385 = vector.load %arg10[%c0_83, %c0_84] : memref<8x32xf32, #tpu.memory_space<vmem>>, vector<8x32xf32>
    tpu.vector_store %arg10[%c0_83, %c0_84], %372 {strides = array<i32>} : memref<8x32xf32, #tpu.memory_space<vmem>>, vector<8x32xf32>,
    %c0_i32_85 = arith.constant 0 : i32
    %386 = arith.cmpi eq, %arg0, %c0_i32_85 : i32
    %387 = arith.extui %386 : i1 to i32
    %c0_i32_86 = arith.constant 0 : i32
    %388 = arith.cmpi ne, %387, %c0_i32_86 : i32
    scf.if %388 {
      %c0_87 = arith.constant 0 : index
      %c0_88 = arith.constant 0 : index
      %389 = vector.load %arg7[%c0_87, %c0_88] : memref<8x32xf32, #tpu.memory_space<vmem>>, vector<8x32xf32>
      tpu.vector_store %arg7[%c0_87, %c0_88], %375 {strides = array<i32>} : memref<8x32xf32, #tpu.memory_space<vmem>>, vector<8x32xf32>,
      %c0_89 = arith.constant 0 : index
      %c0_90 = arith.constant 0 : index
      %390 = vector.load %arg8[%c0_89, %c0_90] : memref<8x32xf32, #tpu.memory_space<vmem>>, vector<8x32xf32>
      tpu.vector_store %arg8[%c0_89, %c0_90], %372 {strides = array<i32>} : memref<8x32xf32, #tpu.memory_space<vmem>>, vector<8x32xf32>,
    } else {
    }
    return
  }
  func.func @transform_0(%arg0: i32) -> (i32, i32, i32) {
    %c0_i32 = arith.constant 0 : i32
    %c0_i32_0 = arith.constant 0 : i32
    %c0_i32_1 = arith.constant 0 : i32
    return %arg0, %c0_i32, %c0_i32_0 : i32, i32, i32
  }
  func.func @transform_1(%arg0: i32) -> (i32, i32) {
    %c0_i32 = arith.constant 0 : i32
    %c0_i32_0 = arith.constant 0 : i32
    %c0_i32_1 = arith.constant 0 : i32
    return %c0_i32, %c0_i32_0 : i32, i32
  }
  func.func @transform_2(%arg0: i32) -> (i32, i32) {
    %c0_i32 = arith.constant 0 : i32
    %c0_i32_0 = arith.constant 0 : i32
    %c0_i32_1 = arith.constant 0 : i32
    return %c0_i32, %c0_i32_0 : i32, i32
  }
  func.func @transform_3(%arg0: i32) -> (i32, i32) {
    %c0_i32 = arith.constant 0 : i32
    %c0_i32_0 = arith.constant 0 : i32
    %c0_i32_1 = arith.constant 0 : i32
    return %c0_i32, %c0_i32_0 : i32, i32
  }
  func.func @transform_4(%arg0: i32) -> (i32, i32) {
    %c0_i32 = arith.constant 0 : i32
    %c0_i32_0 = arith.constant 0 : i32
    %c0_i32_1 = arith.constant 0 : i32
    return %c0_i32, %c0_i32_0 : i32, i32
  }
  func.func @transform_5(%arg0: i32) -> (i32, i32, i32) {
    %c0_i32 = arith.constant 0 : i32
    %c0_i32_0 = arith.constant 0 : i32
    %c0_i32_1 = arith.constant 0 : i32
    return %arg0, %c0_i32, %c0_i32_0 : i32, i32, i32
  }
  func.func @transform_6(%arg0: i32) -> (i32, i32) {
    %c0_i32 = arith.constant 0 : i32
    %c0_i32_0 = arith.constant 0 : i32
    %c0_i32_1 = arith.constant 0 : i32
    return %c0_i32, %c0_i32_0 : i32, i32
  }
  func.func @transform_7(%arg0: i32) -> (i32, i32) {
    %c0_i32 = arith.constant 0 : i32
    %c0_i32_0 = arith.constant 0 : i32
    %c0_i32_1 = arith.constant 0 : i32
    return %c0_i32, %c0_i32_0 : i32, i32
  }
}

</mosaic_0001>

<llo_original>
// kernel: _lstm_layer.2
$region0: #{_lstm_layer.2}
  #allocation0 [shape = 'u32[]', space=smem, size = 0x4, offset = 0x4, fixed_abs, tag = 'smem constant byte address 0x4 - core index']
  #allocation1 [shape = 'u32[144,128]{1,0:T(1,128)}', space=vmem, size = 0x12000, scoped, tag = 'internal scratch']
  %s0 = inlined_call_operand.hbm [shape: f32[64,32], index: 0, kind: input, shape index: {}]
  %s1 = inlined_call_operand.hbm [shape: f32[32,128], index: 1, kind: input, shape index: {}]
  %s2 = inlined_call_operand.vmem [shape: f32[1,128], index: 2, kind: input, shape index: {}]
  %s3 = inlined_call_operand.vmem [shape: f32[64,128], index: 3, kind: output, shape index: {}]
  %s4 = sld [smem:[#allocation0]]
  $region30: #{_lstm_layer.2} parent=0
    _
  %s6 = ssub.s32 1, %s4
  %s7 = scalar_select 0, %s6, %s4
  $region1: #{_lstm_layer.2} parent=0
    #allocation2 [shape = 'u8[32768]{0}', space=vmem, size = 0x8000, scoped, tag = 'input window, operand 0, single buffered']
    #allocation3 [shape = 's32[1]{0}', space=sflag, size = 0x4, scoped, tag = 'scoped memory for _lstm_layer.2']
    #allocation4 [shape = 'u8[16384]{0}', space=vmem, size = 0x4000, scoped, tag = 'input window, operand 1, single buffered']
    #allocation5 [shape = 's32[1]{0}', space=sflag, size = 0x4, scoped, tag = 'scoped memory for _lstm_layer.2']
    %8 = vsyncpa [#allocation3], 0
    %9 = vsyncpa [#allocation5], 0
    // Predicated region
    $region2: #{_lstm_layer.2} parent=1 // pred_check
      _
    $region3: #{_lstm_layer.2} parent=1 // pred_check_branch
      %11 = sbr.rel (0) target = $region5
    $region4: #{_lstm_layer.2} parent=1 // pred_region
      %s13 = ssub.s32 1024, 1024
      %14 = vsyncadd [#allocation3], %s13
      %s15 = sshll.u32 [#allocation2], 4
      %s16 = int_to_ptr.vmem [resolvable:$true] %s15
      %21 = dma.hbm_to_vmem [thread:$0]  %s0, 1024, %s16, [#allocation3], 128, 128, 8
    $region5: #{_lstm_layer.2} parent=1 // pred_fallthru
      _
    // Predicated region
    $region6: #{_lstm_layer.2} parent=1 // pred_check
      _
    $region7: #{_lstm_layer.2} parent=1 // pred_check_branch
      %23 = sbr.rel (0) target = $region9
    $region8: #{_lstm_layer.2} parent=1 // pred_region
      %s25 = ssub.s32 512, 512
      %26 = vsyncadd [#allocation5], %s25
      %s27 = sshll.u32 [#allocation4], 4
      %s28 = int_to_ptr.vmem [resolvable:$true] %s27
      %33 = dma.hbm_to_vmem [thread:$0]  %s1, 512, %s28, [#allocation5], 128, 128, 8
    $region9: #{_lstm_layer.2} parent=1 // pred_fallthru
      _
    // Predicated region
    $region10: #{_lstm_layer.2} parent=1 // pred_check
      _
    $region11: #{_lstm_layer.2} parent=1 // pred_check_branch
      %35 = sbr.rel (0) target = $region13
    $region12: #{_lstm_layer.2} parent=1 // pred_region
      _
    $region13: #{_lstm_layer.2} parent=1 // pred_fallthru
      _
    // Predicated region
    $region14: #{_lstm_layer.2} parent=1 // pred_check
      _
    $region15: #{_lstm_layer.2} parent=1 // pred_check_branch
      %37 = sbr.rel (0) target = $region17
    $region16: #{_lstm_layer.2} parent=1 // pred_region
      %38 = dma.done [#allocation3], 1024
    $region17: #{_lstm_layer.2} parent=1 // pred_fallthru
      _
    // Predicated region
    $region18: #{_lstm_layer.2} parent=1 // pred_check
      _
    $region19: #{_lstm_layer.2} parent=1 // pred_check_branch
      %40 = sbr.rel (0) target = $region21
    $region20: #{_lstm_layer.2} parent=1 // pred_region
      %41 = dma.done [#allocation5], 512
    $region21: #{_lstm_layer.2} parent=1 // pred_fallthru
      _
    %v42 = vld [vmem:[#allocation2] sm:$0xff]
    %v43 = vld [vmem:[#allocation2 + $0x8] sm:$0xff]
    %v44 = vld [vmem:[#allocation2 + $0x10] sm:$0xff]
    %v45 = vld [vmem:[#allocation2 + $0x18] sm:$0xff]
    %v46 = vld [vmem:[#allocation2 + $0x20] sm:$0xff]
    %v47 = vld [vmem:[#allocation2 + $0x28] sm:$0xff]
    %v48 = vld [vmem:[#allocation2 + $0x30] sm:$0xff]
    %v49 = vld [vmem:[#allocation2 + $0x38] sm:$0xff]
    %v50 = vld [vmem:[#allocation4] sm:$0xff]
    %v51 = vld [vmem:[#allocation4 + $0x8] sm:$0xff]
    %v52 = vld [vmem:[#allocation4 + $0x10] sm:$0xff]
    %v53 = vld [vmem:[#allocation4 + $0x18] sm:$0xff]
    %v54 = vld [vmem:[%s2] sm:$0x1]
    %v56 = vlaneseq
    %v57 = vshrl.u32 %v56, 7
    %v58 = vsub.s32 0, %v57
    %v59 = vrot.slane %v54, %v58
    %vm61 = vcmask 261120
    %v63 = vsel %vm61, %v42, 0
    %v66 = vsel %vm61, %v43, 0
    %v69 = vsel %vm61, %v44, 0
    %v72 = vsel %vm61, %v45, 0
    %v75 = vsel %vm61, %v46, 0
    %v78 = vsel %vm61, %v47, 0
    %v81 = vsel %vm61, %v48, 0
    %v84 = vsel %vm61, %v49, 0
    %86 = vmatprep.subr.mxu0 0.0
    %87 = vmatpush1.msra.mxu0 0.0
    %88 = vmatprep.subr.mxu0 0.0
    %89 = vmatpush1.msra.mxu0 0.0
    %90 = vmatprep.subr.mxu0 0.0
    %91 = vmatpush1.msra.mxu0 0.0
    %92 = vmatprep.subr.mxu0 0.0
    %93 = vmatpush1.msra.mxu0 0.0
    %94 = vmatprep.subr.mxu0 0.0
    %95 = vmatpush1.msra.mxu0 0.0
    %96 = vmatprep.subr.mxu0 0.0
    %97 = vmatpush1.msra.mxu0 0.0
    %98 = vmatprep.subr.mxu0 0.0
    %99 = vmatpush1.msra.mxu0 0.0
    %100 = vmatprep.subr.mxu0 0.0
    %101 = vmatpush1.msra.mxu0 0.0
    %102 = vmatprep.subr.mxu0 0.0
    %103 = vmatpush1.msra.mxu0 0.0
    %104 = vmatprep.subr.mxu0 0.0
    %105 = vmatpush1.msra.mxu0 0.0
    %106 = vmatprep.subr.mxu0 0.0
    %107 = vmatpush1.msra.mxu0 0.0
    %108 = vmatprep.subr.mxu0 0.0
    %109 = vmatpush1.msra.mxu0 0.0
    %110 = vmatprep.subr.mxu0 0.0
    %111 = vmatpush1.msra.mxu0 %v53
    %112 = vmatprep.subr.mxu0 0.0
    %113 = vmatpush1.msra.mxu0 %v52
    %114 = vmatprep.subr.mxu0 0.0
    %115 = vmatpush1.msra.mxu0 %v51
    %116 = vmatprep.subr.mxu0 0.0
    %117 = vmatpush1.msra.mxu0 %v50
    %118 = vmatprep.subr.mxu0 0.0
    %119 = vmatpush2.msra.mxu0 0.0
    %120 = vmatprep.subr.mxu0 0.0
    %121 = vmatpush2.msra.mxu0 0.0
    %122 = vmatprep.subr.mxu0 0.0
    %123 = vmatpush2.msra.mxu0 0.0
    %124 = vmatprep.subr.mxu0 0.0
    %125 = vmatpush2.msra.mxu0 0.0
    %126 = vmatprep.subr.mxu0 0.0
    %127 = vmatpush2.msra.mxu0 0.0
    %128 = vmatprep.subr.mxu0 0.0
    %129 = vmatpush2.msra.mxu0 0.0
    %130 = vmatprep.subr.mxu0 0.0
    %131 = vmatpush2.msra.mxu0 0.0
    %132 = vmatprep.subr.mxu0 0.0
    %133 = vmatpush2.msra.mxu0 0.0
    %134 = vmatprep.subr.mxu0 0.0
    %135 = vmatpush2.msra.mxu0 0.0
    %136 = vmatprep.subr.mxu0 0.0
    %137 = vmatpush2.msra.mxu0 0.0
    %138 = vmatprep.subr.mxu0 0.0
    %139 = vmatpush2.msra.mxu0 0.0
    %140 = vmatprep.subr.mxu0 0.0
    %141 = vmatpush2.msra.mxu0 0.0
    %142 = vmatprep.subr.mxu0 0.0
    %143 = vmatpush2.msra.mxu0 0.0
    %144 = vmatprep.subr.mxu0 0.0
    %145 = vmatpush2.msra.mxu0 0.0
    %146 = vmatprep.subr.mxu0 0.0
    %147 = vmatpush2.msra.mxu0 0.0
    %148 = vmatprep.subr.mxu0 0.0
    %149 = vmatpush2.msra.mxu0 0.0
    %150 = vmatprep.mubr.f32.mxu0 0.0
    %151 = vmatmul.mubr.f32.gmra.mxu0 %v63
    %v152 = vpop.f32.mrf.mxu0
    %v153 = vadd.f32 %v59, %v152
    %v154 = vpop.f32.mrf.mxu0
    %155 = vmatprep.mubr.f32.mxu0 0.0
    %156 = vmatmul.mubr.f32.gmra.mxu0 %v66
    %v157 = vpop.f32.mrf.mxu0
    %v158 = vadd.f32 %v59, %v157
    %v159 = vpop.f32.mrf.mxu0
    %160 = vmatprep.mubr.f32.mxu0 0.0
    %161 = vmatmul.mubr.f32.gmra.mxu0 %v69
    %v162 = vpop.f32.mrf.mxu0
    %v163 = vadd.f32 %v59, %v162
    %v164 = vpop.f32.mrf.mxu0
    %165 = vmatprep.mubr.f32.mxu0 0.0
    %166 = vmatmul.mubr.f32.gmra.mxu0 %v72
    %v167 = vpop.f32.mrf.mxu0
    %v168 = vadd.f32 %v59, %v167
    %v169 = vpop.f32.mrf.mxu0
    %170 = vmatprep.mubr.f32.mxu0 0.0
    %171 = vmatmul.mubr.f32.gmra.mxu0 %v75
    %v172 = vpop.f32.mrf.mxu0
    %v173 = vadd.f32 %v59, %v172
    %v174 = vpop.f32.mrf.mxu0
    %175 = vmatprep.mubr.f32.mxu0 0.0
    %176 = vmatmul.mubr.f32.gmra.mxu0 %v78
    %v177 = vpop.f32.mrf.mxu0
    %v178 = vadd.f32 %v59, %v177
    %v179 = vpop.f32.mrf.mxu0
    %180 = vmatprep.mubr.f32.mxu0 0.0
    %181 = vmatmul.mubr.f32.gmra.mxu0 %v81
    %v182 = vpop.f32.mrf.mxu0
    %v183 = vadd.f32 %v59, %v182
    %v184 = vpop.f32.mrf.mxu0
    %185 = vmatprep.mubr.f32.mxu0 0.0
    %186 = vmatmul.mubr.f32.gmra.mxu0 %v84
    %v187 = vpop.f32.mrf.mxu0
    %v188 = vadd.f32 %v59, %v187
    %v189 = vpop.f32.mrf.mxu0
    %190 = vdwg.mxu0
    %191 = vst [vmem:[%s3] sm:$0xff] %v153
    %192 = vst [vmem:[%s3 + $0x8] sm:$0xff] %v158
    %193 = vst [vmem:[%s3 + $0x10] sm:$0xff] %v163
    %194 = vst [vmem:[%s3 + $0x18] sm:$0xff] %v168
    %195 = vst [vmem:[%s3 + $0x20] sm:$0xff] %v173
    %196 = vst [vmem:[%s3 + $0x28] sm:$0xff] %v178
    %197 = vst [vmem:[%s3 + $0x30] sm:$0xff] %v183
    %198 = vst [vmem:[%s3 + $0x38] sm:$0xff] %v188
    // Predicated region
    $region22: #{_lstm_layer.2} parent=1 // pred_check
      _
    $region23: #{_lstm_layer.2} parent=1 // pred_check_branch
      %200 = sbr.rel (0) target = $region25
    $region24: #{_lstm_layer.2} parent=1 // pred_region
      _
    $region25: #{_lstm_layer.2} parent=1 // pred_fallthru
      _
    // Predicated region
    $region26: #{_lstm_layer.2} parent=1 // pred_check
      _
    $region27: #{_lstm_layer.2} parent=1 // pred_check_branch
      %202 = sbr.rel (0) target = $region29
    $region28: #{_lstm_layer.2} parent=1 // pred_region
      _
    $region29: #{_lstm_layer.2} parent=1 // pred_fallthru
      _
    %203 = vsyncpa [#allocation3], 1
    %204 = vsyncpa [#allocation5], 1

// kernel: _lstm_layer.3
$region0: #{_lstm_layer.3}
  #allocation0 [shape = 'u32[]', space=smem, size = 0x4, offset = 0x4, fixed_abs, tag = 'smem constant byte address 0x4 - core index']
  #allocation1 [shape = 'u32[144,128]{1,0:T(1,128)}', space=vmem, size = 0x12000, scoped, tag = 'internal scratch']
  #allocation2 [shape = 'f32[8,32]{1,0:T(8,128)}', space=vmem, size = 0x1000, scoped, tag = 'scratch operand']
  #allocation3 [shape = 'f32[8,32]{1,0:T(8,128)}', space=vmem, size = 0x1000, scoped, tag = 'scratch operand']
  %s0 = inlined_call_operand.vmem [shape: f32[8,8,128], index: 0, kind: input, shape index: {}]
  %s1 = inlined_call_operand.vmem [shape: f32[32,128], index: 1, kind: input, shape index: {}]
  %s2 = inlined_call_operand.vmem [shape: f32[8,32], index: 2, kind: input, shape index: {}]
  %s3 = inlined_call_operand.vmem [shape: f32[8,32], index: 3, kind: input, shape index: {}]
  %s4 = inlined_call_operand.vmem [shape: s32[8,1], index: 4, kind: input, shape index: {}]
  %s5 = inlined_call_operand.hbm [shape: f32[8,8,32], index: 5, kind: output, shape index: {0}]
  %s6 = inlined_call_operand.hbm [shape: f32[8,32], index: 6, kind: output, shape index: {1}]
  %s7 = inlined_call_operand.hbm [shape: f32[8,32], index: 7, kind: output, shape index: {2}]
  %8 = xla_tuple %s5, %s6, %s7
  %s9 = sld [smem:[#allocation0]]
  $region54: #{_lstm_layer.3} parent=0
    _
  %s11 = ssub.s32 1, %s9
  %s12 = scalar_select 0, %s11, %s9
  $region1: #{_lstm_layer.3} parent=0
    #allocation4 [shape = 'u8[32768]{0}', space=vmem, size = 0x8000, scoped, tag = 'output window, operand 0, single buffered']
    #allocation5 [shape = 's32[1]{0}', space=sflag, size = 0x4, scoped, tag = 'scoped memory for _lstm_layer.3']
    #allocation6 [shape = 'u8[4096]{0}', space=vmem, size = 0x1000, scoped, tag = 'output window, operand 1, single buffered']
    #allocation7 [shape = 's32[1]{0}', space=sflag, size = 0x4, scoped, tag = 'scoped memory for _lstm_layer.3']
    #allocation8 [shape = 'u8[4096]{0}', space=vmem, size = 0x1000, scoped, tag = 'output window, operand 2, single buffered']
    %13 = vsyncpa [#allocation5], 0
    %14 = vsyncpa [#allocation7], 0
    // Predicated region
    $region2: #{_lstm_layer.3} parent=1 // pred_check
      _
    $region3: #{_lstm_layer.3} parent=1 // pred_check_branch
      %16 = sbr.rel (0) target = $region5
    $region4: #{_lstm_layer.3} parent=1 // pred_region
      _
    $region5: #{_lstm_layer.3} parent=1 // pred_fallthru
      _
    // Predicated region
    $region6: #{_lstm_layer.3} parent=1 // pred_check
      _
    $region7: #{_lstm_layer.3} parent=1 // pred_check_branch
      %18 = sbr.rel (0) target = $region9
    $region8: #{_lstm_layer.3} parent=1 // pred_region
      _
    $region9: #{_lstm_layer.3} parent=1 // pred_fallthru
      _
    // Predicated region
    $region10: #{_lstm_layer.3} parent=1 // pred_check
      _
    $region11: #{_lstm_layer.3} parent=1 // pred_check_branch
      %20 = sbr.rel (0) target = $region13
    $region12: #{_lstm_layer.3} parent=1 // pred_region
      _
    $region13: #{_lstm_layer.3} parent=1 // pred_fallthru
      _
    // Predicated region
    $region14: #{_lstm_layer.3} parent=1 // pred_check
      _
    $region15: #{_lstm_layer.3} parent=1 // pred_check_branch
      %22 = sbr.rel (0) target = $region17
    $region16: #{_lstm_layer.3} parent=1 // pred_region
      _
    $region17: #{_lstm_layer.3} parent=1 // pred_fallthru
      _
    // Predicated region
    $region18: #{_lstm_layer.3} parent=1 // pred_check
      _
    $region19: #{_lstm_layer.3} parent=1 // pred_check_branch
      %24 = sbr.rel (0) target = $region21
    $region20: #{_lstm_layer.3} parent=1 // pred_region
      _
    $region21: #{_lstm_layer.3} parent=1 // pred_fallthru
      _
    %p25 = scmp.eq.s32.totalorder 0, 0
    // Predicated region
    $region22: #{_lstm_layer.3} parent=1 // pred_check
      %p26 = pneg %p25
    $region23: #{_lstm_layer.3} parent=1 // pred_check_branch
      %28 = sbr.rel (%p26) target = $region25
    $region24: #{_lstm_layer.3} parent=1 // pred_region
      %v29 = vld [vmem:[%s2] sm:$0xff]
      %vm30 = vcmask 261120
      %31 = vst.msk [vmem:[#allocation2] sm:$0xff] %vm30, %v29
      %v32 = vld [vmem:[%s3] sm:$0xff]
      %33 = vst.msk [vmem:[#allocation3] sm:$0xff] %vm30, %v32
    $region25: #{_lstm_layer.3} parent=1 // pred_fallthru
      _
    %v34 = vld [vmem:[%s1] sm:$0xff]
    %v35 = vld [vmem:[%s1 + $0x8] sm:$0xff]
    %v36 = vld [vmem:[%s1 + $0x10] sm:$0xff]
    %v37 = vld [vmem:[%s1 + $0x18] sm:$0xff]
    %v38 = vld [vmem:[%s4] sm:$0xff]
    %s39 = smul.u32 0, 8
    %v40 = vld [vmem:[#allocation2] sm:$0xff]
    %v41 = vld [vmem:[#allocation3] sm:$0xff]
    %v42 = vld [vmem:[%s0] sm:$0xff]
    %vm43 = vcmask 261120
    %v45 = vsel %vm43, %v40, 0
    %47 = vmatprep.subr.mxu0 0.0
    %48 = vmatpush1.msra.mxu0 0.0
    %49 = vmatprep.subr.mxu0 0.0
    %50 = vmatpush1.msra.mxu0 0.0
    %51 = vmatprep.subr.mxu0 0.0
    %52 = vmatpush1.msra.mxu0 0.0
    %53 = vmatprep.subr.mxu0 0.0
    %54 = vmatpush1.msra.mxu0 0.0
    %55 = vmatprep.subr.mxu0 0.0
    %56 = vmatpush1.msra.mxu0 0.0
    %57 = vmatprep.subr.mxu0 0.0
    %58 = vmatpush1.msra.mxu0 0.0
    %59 = vmatprep.subr.mxu0 0.0
    %60 = vmatpush1.msra.mxu0 0.0
    %61 = vmatprep.subr.mxu0 0.0
    %62 = vmatpush1.msra.mxu0 0.0
    %63 = vmatprep.subr.mxu0 0.0
    %64 = vmatpush1.msra.mxu0 0.0
    %65 = vmatprep.subr.mxu0 0.0
    %66 = vmatpush1.msra.mxu0 0.0
    %67 = vmatprep.subr.mxu0 0.0
    %68 = vmatpush1.msra.mxu0 0.0
    %69 = vmatprep.subr.mxu0 0.0
    %70 = vmatpush1.msra.mxu0 0.0
    %71 = vmatprep.subr.mxu0 0.0
    %72 = vmatpush1.msra.mxu0 %v37
    %73 = vmatprep.subr.mxu0 0.0
    %74 = vmatpush1.msra.mxu0 %v36
    %75 = vmatprep.subr.mxu0 0.0
    %76 = vmatpush1.msra.mxu0 %v35
    %77 = vmatprep.subr.mxu0 0.0
    %78 = vmatpush1.msra.mxu0 %v34
    %79 = vmatprep.subr.mxu0 0.0
    %80 = vmatpush2.msra.mxu0 0.0
    %81 = vmatprep.subr.mxu0 0.0
    %82 = vmatpush2.msra.mxu0 0.0
    %83 = vmatprep.subr.mxu0 0.0
    %84 = vmatpush2.msra.mxu0 0.0
    %85 = vmatprep.subr.mxu0 0.0
    %86 = vmatpush2.msra.mxu0 0.0
    %87 = vmatprep.subr.mxu0 0.0
    %88 = vmatpush2.msra.mxu0 0.0
    %89 = vmatprep.subr.mxu0 0.0
    %90 = vmatpush2.msra.mxu0 0.0
    %91 = vmatprep.subr.mxu0 0.0
    %92 = vmatpush2.msra.mxu0 0.0
    %93 = vmatprep.subr.mxu0 0.0
    %94 = vmatpush2.msra.mxu0 0.0
    %95 = vmatprep.subr.mxu0 0.0
    %96 = vmatpush2.msra.mxu0 0.0
    %97 = vmatprep.subr.mxu0 0.0
    %98 = vmatpush2.msra.mxu0 0.0
    %99 = vmatprep.subr.mxu0 0.0
    %100 = vmatpush2.msra.mxu0 0.0
    %101 = vmatprep.subr.mxu0 0.0
    %102 = vmatpush2.msra.mxu0 0.0
    %103 = vmatprep.subr.mxu0 0.0
    %104 = vmatpush2.msra.mxu0 0.0
    %105 = vmatprep.subr.mxu0 0.0
    %106 = vmatpush2.msra.mxu0 0.0
    %107 = vmatprep.subr.mxu0 0.0
    %108 = vmatpush2.msra.mxu0 0.0
    %109 = vmatprep.subr.mxu0 0.0
    %110 = vmatpush2.msra.mxu0 0.0
    %111 = vmatprep.mubr.f32.mxu0 0.0
    %112 = vmatmul.mubr.f32.gmra.mxu0 %v45
    %v113 = vpop.f32.mrf.mxu0
    %v114 = vadd.f32 0.0, %v113
    %v115 = vpop.f32.mrf.mxu0
    %116 = vdwg.mxu0
    %v117 = vadd.f32 %v42, %v114
    %v118 = vxor.u32 %v117, 2147483648
    %v119 = vmul.f32 %v118, 1.442695
    %v120 = vpow.pop %v119
    %v121 = vadd.f32 %v120, 1.0
    %v122 = vrcp.pop %v121
    %v123 = vmul.f32 1.0, %v122
    %v124 = vtanh.pop %v117
    %126 = vrot.lane.b32.xlu0 %v41, 32
    %v127 = vpop.permute.xlu0 %126
    %v129 = vmul.f32 %v123, %v127
    %131 = vrot.lane.b32.xlu0 %v124, 64
    %v132 = vpop.permute.xlu0 %131
    %v134 = vmul.f32 %v123, %v132
    %136 = vrot.lane.b32.xlu0 %v134, 32
    %v137 = vpop.permute.xlu0 %136
    %v139 = vadd.f32 %v129, %v137
    %v140 = vtanh.pop %v139
    %142 = vrot.lane.b32.xlu0 %v140, 64
    %v143 = vpop.permute.xlu0 %142
    %v145 = vmul.f32 %v123, %v143
    %v146 = vstv %s39
    %vm147 = vcmp.lt.s32.totalorder %v146, %v38
    %v148 = vsel %vm147, 1, 0
    %149 = vset.pattern.permute.xlu0 0
    %150 = vperm.xlu0 %149, %v148
    %v151 = vpop.permute.xlu0 %150
    %vm152 = vcmp.eq.s32.totalorder %v151, 1
    %v153 = vsel %vm152, %v139, %v127
    %154 = vrot.lane.b32.xlu0 %v40, 96
    %v155 = vpop.permute.xlu0 %154
    %v157 = vsel %vm152, %v145, %v155
    %v158 = vsel %vm152, %v145, 0.0
    %160 = vrot.lane.b32.xlu0 %v158, 32
    %v161 = vpop.permute.xlu0 %160
    %163 = vst.msk [vmem:[#allocation4] sm:$0xff] %vm43, %v161
    %s164 = scalar_lea.vmem %s0, 8
    %v165 = vld [vmem:[%s164] sm:$0xff]
    %167 = vrot.lane.b32.xlu0 %v157, 32
    %v168 = vpop.permute.xlu0 %167
    %v169 = vsel %vm43, %v168, 0
    %171 = vmatprep.subr.mxu0 0.0
    %172 = vmatpush1.msra.mxu0 0.0
    %173 = vmatprep.subr.mxu0 0.0
    %174 = vmatpush1.msra.mxu0 0.0
    %175 = vmatprep.subr.mxu0 0.0
    %176 = vmatpush1.msra.mxu0 0.0
    %177 = vmatprep.subr.mxu0 0.0
    %178 = vmatpush1.msra.mxu0 0.0
    %179 = vmatprep.subr.mxu0 0.0
    %180 = vmatpush1.msra.mxu0 0.0
    %181 = vmatprep.subr.mxu0 0.0
    %182 = vmatpush1.msra.mxu0 0.0
    %183 = vmatprep.subr.mxu0 0.0
    %184 = vmatpush1.msra.mxu0 0.0
    %185 = vmatprep.subr.mxu0 0.0
    %186 = vmatpush1.msra.mxu0 0.0
    %187 = vmatprep.subr.mxu0 0.0
    %188 = vmatpush1.msra.mxu0 0.0
    %189 = vmatprep.subr.mxu0 0.0
    %190 = vmatpush1.msra.mxu0 0.0
    %191 = vmatprep.subr.mxu0 0.0
    %192 = vmatpush1.msra.mxu0 0.0
    %193 = vmatprep.subr.mxu0 0.0
    %194 = vmatpush1.msra.mxu0 0.0
    %195 = vmatprep.subr.mxu0 0.0
    %196 = vmatpush1.msra.mxu0 %v37
    %197 = vmatprep.subr.mxu0 0.0
    %198 = vmatpush1.msra.mxu0 %v36
    %199 = vmatprep.subr.mxu0 0.0
    %200 = vmatpush1.msra.mxu0 %v35
    %201 = vmatprep.subr.mxu0 0.0
    %202 = vmatpush1.msra.mxu0 %v34
    %203 = vmatprep.subr.mxu0 0.0
    %204 = vmatpush2.msra.mxu0 0.0
    %205 = vmatprep.subr.mxu0 0.0
    %206 = vmatpush2.msra.mxu0 0.0
    %207 = vmatprep.subr.mxu0 0.0
    %208 = vmatpush2.msra.mxu0 0.0
    %209 = vmatprep.subr.mxu0 0.0
    %210 = vmatpush2.msra.mxu0 0.0
    %211 = vmatprep.subr.mxu0 0.0
    %212 = vmatpush2.msra.mxu0 0.0
    %213 = vmatprep.subr.mxu0 0.0
    %214 = vmatpush2.msra.mxu0 0.0
    %215 = vmatprep.subr.mxu0 0.0
    %216 = vmatpush2.msra.mxu0 0.0
    %217 = vmatprep.subr.mxu0 0.0
    %218 = vmatpush2.msra.mxu0 0.0
    %219 = vmatprep.subr.mxu0 0.0
    %220 = vmatpush2.msra.mxu0 0.0
    %221 = vmatprep.subr.mxu0 0.0
    %222 = vmatpush2.msra.mxu0 0.0
    %223 = vmatprep.subr.mxu0 0.0
    %224 = vmatpush2.msra.mxu0 0.0
    %225 = vmatprep.subr.mxu0 0.0
    %226 = vmatpush2.msra.mxu0 0.0
    %227 = vmatprep.subr.mxu0 0.0
    %228 = vmatpush2.msra.mxu0 0.0
    %229 = vmatprep.subr.mxu0 0.0
    %230 = vmatpush2.msra.mxu0 0.0
    %231 = vmatprep.subr.mxu0 0.0
    %232 = vmatpush2.msra.mxu0 0.0
    %233 = vmatprep.subr.mxu0 0.0
    %234 = vmatpush2.msra.mxu0 0.0
    %235 = vmatprep.mubr.f32.mxu0 0.0
    %236 = vmatmul.mubr.f32.gmra.mxu0 %v169
    %v237 = vpop.f32.mrf.mxu0
    %v238 = vadd.f32 0.0, %v237
    %v239 = vpop.f32.mrf.mxu0
    %240 = vdwg.mxu0
    %v241 = vadd.f32 %v165, %v238
    %v242 = vxor.u32 %v241, 2147483648
    %v243 = vmul.f32 %v242, 1.442695
    %v244 = vpow.pop %v243
    %v245 = vadd.f32 %v244, 1.0
    %v246 = vrcp.pop %v245
    %v247 = vmul.f32 1.0, %v246
    %v248 = vtanh.pop %v241
    %v249 = vmul.f32 %v247, %v153
    %251 = vrot.lane.b32.xlu0 %v248, 64
    %v252 = vpop.permute.xlu0 %251
    %v254 = vmul.f32 %v247, %v252
    %256 = vrot.lane.b32.xlu0 %v254, 32
    %v257 = vpop.permute.xlu0 %256
    %v259 = vadd.f32 %v249, %v257
    %v260 = vtanh.pop %v259
    %262 = vrot.lane.b32.xlu0 %v260, 64
    %v263 = vpop.permute.xlu0 %262
    %v265 = vmul.f32 %v247, %v263
    %s266 = sadd.s32 %s39, 1
    %v267 = vstv %s266
    %vm268 = vcmp.lt.s32.totalorder %v267, %v38
    %v269 = vsel %vm268, 1, 0
    %270 = vset.pattern.permute.xlu0 0
    %271 = vperm.xlu0 %270, %v269
    %v272 = vpop.permute.xlu0 %271
    %vm273 = vcmp.eq.s32.totalorder %v272, 1
    %v274 = vsel %vm273, %v259, %v153
    %v275 = vsel %vm273, %v265, %v157
    %v276 = vsel %vm273, %v265, 0.0
    %278 = vrot.lane.b32.xlu0 %v276, 32
    %v279 = vpop.permute.xlu0 %278
    %s281 = scalar_lea.vmem [#allocation4], 8
    %282 = vst.msk [vmem:[%s281] sm:$0xff] %vm43, %v279
    %s283 = scalar_lea.vmem %s0, 16
    %v284 = vld [vmem:[%s283] sm:$0xff]
    %286 = vrot.lane.b32.xlu0 %v275, 32
    %v287 = vpop.permute.xlu0 %286
    %v288 = vsel %vm43, %v287, 0
    %290 = vmatprep.subr.mxu0 0.0
    %291 = vmatpush1.msra.mxu0 0.0
    %292 = vmatprep.subr.mxu0 0.0
    %293 = vmatpush1.msra.mxu0 0.0
    %294 = vmatprep.subr.mxu0 0.0
    %295 = vmatpush1.msra.mxu0 0.0
    %296 = vmatprep.subr.mxu0 0.0
    %297 = vmatpush1.msra.mxu0 0.0
    %298 = vmatprep.subr.mxu0 0.0
    %299 = vmatpush1.msra.mxu0 0.0
    %300 = vmatprep.subr.mxu0 0.0
    %301 = vmatpush1.msra.mxu0 0.0
    %302 = vmatprep.subr.mxu0 0.0
    %303 = vmatpush1.msra.mxu0 0.0
    %304 = vmatprep.subr.mxu0 0.0
    %305 = vmatpush1.msra.mxu0 0.0
    %306 = vmatprep.subr.mxu0 0.0
    %307 = vmatpush1.msra.mxu0 0.0
    %308 = vmatprep.subr.mxu0 0.0
    %309 = vmatpush1.msra.mxu0 0.0
    %310 = vmatprep.subr.mxu0 0.0
    %311 = vmatpush1.msra.mxu0 0.0
    %312 = vmatprep.subr.mxu0 0.0
    %313 = vmatpush1.msra.mxu0 0.0
    %314 = vmatprep.subr.mxu0 0.0
    %315 = vmatpush1.msra.mxu0 %v37
    %316 = vmatprep.subr.mxu0 0.0
    %317 = vmatpush1.msra.mxu0 %v36
    %318 = vmatprep.subr.mxu0 0.0
    %319 = vmatpush1.msra.mxu0 %v35
    %320 = vmatprep.subr.mxu0 0.0
    %321 = vmatpush1.msra.mxu0 %v34
    %322 = vmatprep.subr.mxu0 0.0
    %323 = vmatpush2.msra.mxu0 0.0
    %324 = vmatprep.subr.mxu0 0.0
    %325 = vmatpush2.msra.mxu0 0.0
    %326 = vmatprep.subr.mxu0 0.0
    %327 = vmatpush2.msra.mxu0 0.0
    %328 = vmatprep.subr.mxu0 0.0
    %329 = vmatpush2.msra.mxu0 0.0
    %330 = vmatprep.subr.mxu0 0.0
    %331 = vmatpush2.msra.mxu0 0.0
    %332 = vmatprep.subr.mxu0 0.0
    %333 = vmatpush2.msra.mxu0 0.0
    %334 = vmatprep.subr.mxu0 0.0
    %335 = vmatpush2.msra.mxu0 0.0
    %336 = vmatprep.subr.mxu0 0.0
    %337 = vmatpush2.msra.mxu0 0.0
    %338 = vmatprep.subr.mxu0 0.0
    %339 = vmatpush2.msra.mxu0 0.0
    %340 = vmatprep.subr.mxu0 0.0
    %341 = vmatpush2.msra.mxu0 0.0
    %342 = vmatprep.subr.mxu0 0.0
    %343 = vmatpush2.msra.mxu0 0.0
    %344 = vmatprep.subr.mxu0 0.0
    %345 = vmatpush2.msra.mxu0 0.0
    %346 = vmatprep.subr.mxu0 0.0
    %347 = vmatpush2.msra.mxu0 0.0
    %348 = vmatprep.subr.mxu0 0.0
    %349 = vmatpush2.msra.mxu0 0.0
    %350 = vmatprep.subr.mxu0 0.0
    %351 = vmatpush2.msra.mxu0 0.0
    %352 = vmatprep.subr.mxu0 0.0
    %353 = vmatpush2.msra.mxu0 0.0
    %354 = vmatprep.mubr.f32.mxu0 0.0
    %355 = vmatmul.mubr.f32.gmra.mxu0 %v288
    %v356 = vpop.f32.mrf.mxu0
    %v357 = vadd.f32 0.0, %v356
    %v358 = vpop.f32.mrf.mxu0
    %359 = vdwg.mxu0
    %v360 = vadd.f32 %v284, %v357
    %v361 = vxor.u32 %v360, 2147483648
    %v362 = vmul.f32 %v361, 1.442695
    %v363 = vpow.pop %v362
    %v364 = vadd.f32 %v363, 1.0
    %v365 = vrcp.pop %v364
    %v366 = vmul.f32 1.0, %v365
    %v367 = vtanh.pop %v360
    %v368 = vmul.f32 %v366, %v274
    %370 = vrot.lane.b32.xlu0 %v367, 64
    %v371 = vpop.permute.xlu0 %370
    %v373 = vmul.f32 %v366, %v371
    %375 = vrot.lane.b32.xlu0 %v373, 32
    %v376 = vpop.permute.xlu0 %375
    %v378 = vadd.f32 %v368, %v376
    %v379 = vtanh.pop %v378
    %381 = vrot.lane.b32.xlu0 %v379, 64
    %v382 = vpop.permute.xlu0 %381
    %v384 = vmul.f32 %v366, %v382
    %s385 = sadd.s32 %s39, 2
    %v386 = vstv %s385
    %vm387 = vcmp.lt.s32.totalorder %v386, %v38
    %v388 = vsel %vm387, 1, 0
    %389 = vset.pattern.permute.xlu0 0
    %390 = vperm.xlu0 %389, %v388
    %v391 = vpop.permute.xlu0 %390
    %vm392 = vcmp.eq.s32.totalorder %v391, 1
    %v393 = vsel %vm392, %v378, %v274
    %v394 = vsel %vm392, %v384, %v275
    %v395 = vsel %vm392, %v384, 0.0
    %397 = vrot.lane.b32.xlu0 %v395, 32
    %v398 = vpop.permute.xlu0 %397
    %s400 = scalar_lea.vmem [#allocation4], 16
    %401 = vst.msk [vmem:[%s400] sm:$0xff] %vm43, %v398
    %s402 = scalar_lea.vmem %s0, 24
    %v403 = vld [vmem:[%s402] sm:$0xff]
    %405 = vrot.lane.b32.xlu0 %v394, 32
    %v406 = vpop.permute.xlu0 %405
    %v407 = vsel %vm43, %v406, 0
    %409 = vmatprep.subr.mxu0 0.0
    %410 = vmatpush1.msra.mxu0 0.0
    %411 = vmatprep.subr.mxu0 0.0
    %412 = vmatpush1.msra.mxu0 0.0
    %413 = vmatprep.subr.mxu0 0.0
    %414 = vmatpush1.msra.mxu0 0.0
    %415 = vmatprep.subr.mxu0 0.0
    %416 = vmatpush1.msra.mxu0 0.0
    %417 = vmatprep.subr.mxu0 0.0
    %418 = vmatpush1.msra.mxu0 0.0
    %419 = vmatprep.subr.mxu0 0.0
    %420 = vmatpush1.msra.mxu0 0.0
    %421 = vmatprep.subr.mxu0 0.0
    %422 = vmatpush1.msra.mxu0 0.0
    %423 = vmatprep.subr.mxu0 0.0
    %424 = vmatpush1.msra.mxu0 0.0
    %425 = vmatprep.subr.mxu0 0.0
    %426 = vmatpush1.msra.mxu0 0.0
    %427 = vmatprep.subr.mxu0 0.0
    %428 = vmatpush1.msra.mxu0 0.0
    %429 = vmatprep.subr.mxu0 0.0
    %430 = vmatpush1.msra.mxu0 0.0
    %431 = vmatprep.subr.mxu0 0.0
    %432 = vmatpush1.msra.mxu0 0.0
    %433 = vmatprep.subr.mxu0 0.0
    %434 = vmatpush1.msra.mxu0 %v37
    %435 = vmatprep.subr.mxu0 0.0
    %436 = vmatpush1.msra.mxu0 %v36
    %437 = vmatprep.subr.mxu0 0.0
    %438 = vmatpush1.msra.mxu0 %v35
    %439 = vmatprep.subr.mxu0 0.0
    %440 = vmatpush1.msra.mxu0 %v34
    %441 = vmatprep.subr.mxu0 0.0
    %442 = vmatpush2.msra.mxu0 0.0
    %443 = vmatprep.subr.mxu0 0.0
    %444 = vmatpush2.msra.mxu0 0.0
    %445 = vmatprep.subr.mxu0 0.0
    %446 = vmatpush2.msra.mxu0 0.0
    %447 = vmatprep.subr.mxu0 0.0
    %448 = vmatpush2.msra.mxu0 0.0
    %449 = vmatprep.subr.mxu0 0.0
    %450 = vmatpush2.msra.mxu0 0.0
    %451 = vmatprep.subr.mxu0 0.0
    %452 = vmatpush2.msra.mxu0 0.0
    %453 = vmatprep.subr.mxu0 0.0
    %454 = vmatpush2.msra.mxu0 0.0
    %455 = vmatprep.subr.mxu0 0.0
    %456 = vmatpush2.msra.mxu0 0.0
    %457 = vmatprep.subr.mxu0 0.0
    %458 = vmatpush2.msra.mxu0 0.0
    %459 = vmatprep.subr.mxu0 0.0
    %460 = vmatpush2.msra.mxu0 0.0
    %461 = vmatprep.subr.mxu0 0.0
    %462 = vmatpush2.msra.mxu0 0.0
    %463 = vmatprep.subr.mxu0 0.0
    %464 = vmatpush2.msra.mxu0 0.0
    %465 = vmatprep.subr.mxu0 0.0
    %466 = vmatpush2.msra.mxu0 0.0
    %467 = vmatprep.subr.mxu0 0.0
    %468 = vmatpush2.msra.mxu0 0.0
    %469 = vmatprep.subr.mxu0 0.0
    %470 = vmatpush2.msra.mxu0 0.0
    %471 = vmatprep.subr.mxu0 0.0
    %472 = vmatpush2.msra.mxu0 0.0
    %473 = vmatprep.mubr.f32.mxu0 0.0
    %474 = vmatmul.mubr.f32.gmra.mxu0 %v407
    %v475 = vpop.f32.mrf.mxu0
    %v476 = vadd.f32 0.0, %v475
    %v477 = vpop.f32.mrf.mxu0
    %478 = vdwg.mxu0
    %v479 = vadd.f32 %v403, %v476
    %v480 = vxor.u32 %v479, 2147483648
    %v481 = vmul.f32 %v480, 1.442695
    %v482 = vpow.pop %v481
    %v483 = vadd.f32 %v482, 1.0
    %v484 = vrcp.pop %v483
    %v485 = vmul.f32 1.0, %v484
    %v486 = vtanh.pop %v479
    %v487 = vmul.f32 %v485, %v393
    %489 = vrot.lane.b32.xlu0 %v486, 64
    %v490 = vpop.permute.xlu0 %489
    %v492 = vmul.f32 %v485, %v490
    %494 = vrot.lane.b32.xlu0 %v492, 32
    %v495 = vpop.permute.xlu0 %494
    %v497 = vadd.f32 %v487, %v495
    %v498 = vtanh.pop %v497
    %500 = vrot.lane.b32.xlu0 %v498, 64
    %v501 = vpop.permute.xlu0 %500
    %v503 = vmul.f32 %v485, %v501
    %s504 = sadd.s32 %s39, 3
    %v505 = vstv %s504
    %vm506 = vcmp.lt.s32.totalorder %v505, %v38
    %v507 = vsel %vm506, 1, 0
    %508 = vset.pattern.permute.xlu0 0
    %509 = vperm.xlu0 %508, %v507
    %v510 = vpop.permute.xlu0 %509
    %vm511 = vcmp.eq.s32.totalorder %v510, 1
    %v512 = vsel %vm511, %v497, %v393
    %v513 = vsel %vm511, %v503, %v394
    %v514 = vsel %vm511, %v503, 0.0
    %516 = vrot.lane.b32.xlu0 %v514, 32
    %v517 = vpop.permute.xlu0 %516
    %s519 = scalar_lea.vmem [#allocation4], 24
    %520 = vst.msk [vmem:[%s519] sm:$0xff] %vm43, %v517
    %s521 = scalar_lea.vmem %s0, 32
    %v522 = vld [vmem:[%s521] sm:$0xff]
    %524 = vrot.lane.b32.xlu0 %v513, 32
    %v525 = vpop.permute.xlu0 %524
    %v526 = vsel %vm43, %v525, 0
    %528 = vmatprep.subr.mxu0 0.0
    %529 = vmatpush1.msra.mxu0 0.0
    %530 = vmatprep.subr.mxu0 0.0
    %531 = vmatpush1.msra.mxu0 0.0
    %532 = vmatprep.subr.mxu0 0.0
    %533 = vmatpush1.msra.mxu0 0.0
    %534 = vmatprep.subr.mxu0 0.0
    %535 = vmatpush1.msra.mxu0 0.0
    %536 = vmatprep.subr.mxu0 0.0
    %537 = vmatpush1.msra.mxu0 0.0
    %538 = vmatprep.subr.mxu0 0.0
    %539 = vmatpush1.msra.mxu0 0.0
    %540 = vmatprep.subr.mxu0 0.0
    %541 = vmatpush1.msra.mxu0 0.0
    %542 = vmatprep.subr.mxu0 0.0
    %543 = vmatpush1.msra.mxu0 0.0
    %544 = vmatprep.subr.mxu0 0.0
    %545 = vmatpush1.msra.mxu0 0.0
    %546 = vmatprep.subr.mxu0 0.0
    %547 = vmatpush1.msra.mxu0 0.0
    %548 = vmatprep.subr.mxu0 0.0
    %549 = vmatpush1.msra.mxu0 0.0
    %550 = vmatprep.subr.mxu0 0.0
    %551 = vmatpush1.msra.mxu0 0.0
    %552 = vmatprep.subr.mxu0 0.0
    %553 = vmatpush1.msra.mxu0 %v37
    %554 = vmatprep.subr.mxu0 0.0
    %555 = vmatpush1.msra.mxu0 %v36
    %556 = vmatprep.subr.mxu0 0.0
    %557 = vmatpush1.msra.mxu0 %v35
    %558 = vmatprep.subr.mxu0 0.0
    %559 = vmatpush1.msra.mxu0 %v34
    %560 = vmatprep.subr.mxu0 0.0
    %561 = vmatpush2.msra.mxu0 0.0
    %562 = vmatprep.subr.mxu0 0.0
    %563 = vmatpush2.msra.mxu0 0.0
    %564 = vmatprep.subr.mxu0 0.0
    %565 = vmatpush2.msra.mxu0 0.0
    %566 = vmatprep.subr.mxu0 0.0
    %567 = vmatpush2.msra.mxu0 0.0
    %568 = vmatprep.subr.mxu0 0.0
    %569 = vmatpush2.msra.mxu0 0.0
    %570 = vmatprep.subr.mxu0 0.0
    %571 = vmatpush2.msra.mxu0 0.0
    %572 = vmatprep.subr.mxu0 0.0
    %573 = vmatpush2.msra.mxu0 0.0
    %574 = vmatprep.subr.mxu0 0.0
    %575 = vmatpush2.msra.mxu0 0.0
    %576 = vmatprep.subr.mxu0 0.0
    %577 = vmatpush2.msra.mxu0 0.0
    %578 = vmatprep.subr.mxu0 0.0
    %579 = vmatpush2.msra.mxu0 0.0
    %580 = vmatprep.subr.mxu0 0.0
    %581 = vmatpush2.msra.mxu0 0.0
    %582 = vmatprep.subr.mxu0 0.0
    %583 = vmatpush2.msra.mxu0 0.0
    %584 = vmatprep.subr.mxu0 0.0
    %585 = vmatpush2.msra.mxu0 0.0
    %586 = vmatprep.subr.mxu0 0.0
    %587 = vmatpush2.msra.mxu0 0.0
    %588 = vmatprep.subr.mxu0 0.0
    %589 = vmatpush2.msra.mxu0 0.0
    %590 = vmatprep.subr.mxu0 0.0
    %591 = vmatpush2.msra.mxu0 0.0
    %592 = vmatprep.mubr.f32.mxu0 0.0
    %593 = vmatmul.mubr.f32.gmra.mxu0 %v526
    %v594 = vpop.f32.mrf.mxu0
    %v595 = vadd.f32 0.0, %v594
    %v596 = vpop.f32.mrf.mxu0
    %597 = vdwg.mxu0
    %v598 = vadd.f32 %v522, %v595
    %v599 = vxor.u32 %v598, 2147483648
    %v600 = vmul.f32 %v599, 1.442695
    %v601 = vpow.pop %v600
    %v602 = vadd.f32 %v601, 1.0
    %v603 = vrcp.pop %v602
    %v604 = vmul.f32 1.0, %v603
    %v605 = vtanh.pop %v598
    %v606 = vmul.f32 %v604, %v512
    %608 = vrot.lane.b32.xlu0 %v605, 64
    %v609 = vpop.permute.xlu0 %608
    %v611 = vmul.f32 %v604, %v609
    %613 = vrot.lane.b32.xlu0 %v611, 32
    %v614 = vpop.permute.xlu0 %613
    %v616 = vadd.f32 %v606, %v614
    %v617 = vtanh.pop %v616
    %619 = vrot.lane.b32.xlu0 %v617, 64
    %v620 = vpop.permute.xlu0 %619
    %v622 = vmul.f32 %v604, %v620
    %s623 = sadd.s32 %s39, 4
    %v624 = vstv %s623
    %vm625 = vcmp.lt.s32.totalorder %v624, %v38
    %v626 = vsel %vm625, 1, 0
    %627 = vset.pattern.permute.xlu0 0
    %628 = vperm.xlu0 %627, %v626
    %v629 = vpop.permute.xlu0 %628
    %vm630 = vcmp.eq.s32.totalorder %v629, 1
    %v631 = vsel %vm630, %v616, %v512
    %v632 = vsel %vm630, %v622, %v513
    %v633 = vsel %vm630, %v622, 0.0
    %635 = vrot.lane.b32.xlu0 %v633, 32
    %v636 = vpop.permute.xlu0 %635
    %s638 = scalar_lea.vmem [#allocation4], 32
    %639 = vst.msk [vmem:[%s638] sm:$0xff] %vm43, %v636
    %s640 = scalar_lea.vmem %s0, 40
    %v641 = vld [vmem:[%s640] sm:$0xff]
    %643 = vrot.lane.b32.xlu0 %v632, 32
    %v644 = vpop.permute.xlu0 %643
    %v645 = vsel %vm43, %v644, 0
    %647 = vmatprep.subr.mxu0 0.0
    %648 = vmatpush1.msra.mxu0 0.0
    %649 = vmatprep.subr.mxu0 0.0
    %650 = vmatpush1.msra.mxu0 0.0
    %651 = vmatprep.subr.mxu0 0.0
    %652 = vmatpush1.msra.mxu0 0.0
    %653 = vmatprep.subr.mxu0 0.0
    %654 = vmatpush1.msra.mxu0 0.0
    %655 = vmatprep.subr.mxu0 0.0
    %656 = vmatpush1.msra.mxu0 0.0
    %657 = vmatprep.subr.mxu0 0.0
    %658 = vmatpush1.msra.mxu0 0.0
    %659 = vmatprep.subr.mxu0 0.0
    %660 = vmatpush1.msra.mxu0 0.0
    %661 = vmatprep.subr.mxu0 0.0
    %662 = vmatpush1.msra.mxu0 0.0
    %663 = vmatprep.subr.mxu0 0.0
    %664 = vmatpush1.msra.mxu0 0.0
    %665 = vmatprep.subr.mxu0 0.0
    %666 = vmatpush1.msra.mxu0 0.0
    %667 = vmatprep.subr.mxu0 0.0
    %668 = vmatpush1.msra.mxu0 0.0
    %669 = vmatprep.subr.mxu0 0.0
    %670 = vmatpush1.msra.mxu0 0.0
    %671 = vmatprep.subr.mxu0 0.0
    %672 = vmatpush1.msra.mxu0 %v37
    %673 = vmatprep.subr.mxu0 0.0
    %674 = vmatpush1.msra.mxu0 %v36
    %675 = vmatprep.subr.mxu0 0.0
    %676 = vmatpush1.msra.mxu0 %v35
    %677 = vmatprep.subr.mxu0 0.0
    %678 = vmatpush1.msra.mxu0 %v34
    %679 = vmatprep.subr.mxu0 0.0
    %680 = vmatpush2.msra.mxu0 0.0
    %681 = vmatprep.subr.mxu0 0.0
    %682 = vmatpush2.msra.mxu0 0.0
    %683 = vmatprep.subr.mxu0 0.0
    %684 = vmatpush2.msra.mxu0 0.0
    %685 = vmatprep.subr.mxu0 0.0
    %686 = vmatpush2.msra.mxu0 0.0
    %687 = vmatprep.subr.mxu0 0.0
    %688 = vmatpush2.msra.mxu0 0.0
    %689 = vmatprep.subr.mxu0 0.0
    %690 = vmatpush2.msra.mxu0 0.0
    %691 = vmatprep.subr.mxu0 0.0
    %692 = vmatpush2.msra.mxu0 0.0
    %693 = vmatprep.subr.mxu0 0.0
    %694 = vmatpush2.msra.mxu0 0.0
    %695 = vmatprep.subr.mxu0 0.0
    %696 = vmatpush2.msra.mxu0 0.0
    %697 = vmatprep.subr.mxu0 0.0
    %698 = vmatpush2.msra.mxu0 0.0
    %699 = vmatprep.subr.mxu0 0.0
    %700 = vmatpush2.msra.mxu0 0.0
    %701 = vmatprep.subr.mxu0 0.0
    %702 = vmatpush2.msra.mxu0 0.0
    %703 = vmatprep.subr.mxu0 0.0
    %704 = vmatpush2.msra.mxu0 0.0
    %705 = vmatprep.subr.mxu0 0.0
    %706 = vmatpush2.msra.mxu0 0.0
    %707 = vmatprep.subr.mxu0 0.0
    %708 = vmatpush2.msra.mxu0 0.0
    %709 = vmatprep.subr.mxu0 0.0
    %710 = vmatpush2.msra.mxu0 0.0
    %711 = vmatprep.mubr.f32.mxu0 0.0
    %712 = vmatmul.mubr.f32.gmra.mxu0 %v645
    %v713 = vpop.f32.mrf.mxu0
    %v714 = vadd.f32 0.0, %v713
    %v715 = vpop.f32.mrf.mxu0
    %716 = vdwg.mxu0
    %v717 = vadd.f32 %v641, %v714
    %v718 = vxor.u32 %v717, 2147483648
    %v719 = vmul.f32 %v718, 1.442695
    %v720 = vpow.pop %v719
    %v721 = vadd.f32 %v720, 1.0
    %v722 = vrcp.pop %v721
    %v723 = vmul.f32 1.0, %v722
    %v724 = vtanh.pop %v717
    %v725 = vmul.f32 %v723, %v631
    %727 = vrot.lane.b32.xlu0 %v724, 64
    %v728 = vpop.permute.xlu0 %727
    %v730 = vmul.f32 %v723, %v728
    %732 = vrot.lane.b32.xlu0 %v730, 32
    %v733 = vpop.permute.xlu0 %732
    %v735 = vadd.f32 %v725, %v733
    %v736 = vtanh.pop %v735
    %738 = vrot.lane.b32.xlu0 %v736, 64
    %v739 = vpop.permute.xlu0 %738
    %v741 = vmul.f32 %v723, %v739
    %s742 = sadd.s32 %s39, 5
    %v743 = vstv %s742
    %vm744 = vcmp.lt.s32.totalorder %v743, %v38
    %v745 = vsel %vm744, 1, 0
    %746 = vset.pattern.permute.xlu0 0
    %747 = vperm.xlu0 %746, %v745
    %v748 = vpop.permute.xlu0 %747
    %vm749 = vcmp.eq.s32.totalorder %v748, 1
    %v750 = vsel %vm749, %v735, %v631
    %v751 = vsel %vm749, %v741, %v632
    %v752 = vsel %vm749, %v741, 0.0
    %754 = vrot.lane.b32.xlu0 %v752, 32
    %v755 = vpop.permute.xlu0 %754
    %s757 = scalar_lea.vmem [#allocation4], 40
    %758 = vst.msk [vmem:[%s757] sm:$0xff] %vm43, %v755
    %s759 = scalar_lea.vmem %s0, 48
    %v760 = vld [vmem:[%s759] sm:$0xff]
    %762 = vrot.lane.b32.xlu0 %v751, 32
    %v763 = vpop.permute.xlu0 %762
    %v764 = vsel %vm43, %v763, 0
    %766 = vmatprep.subr.mxu0 0.0
    %767 = vmatpush1.msra.mxu0 0.0
    %768 = vmatprep.subr.mxu0 0.0
    %769 = vmatpush1.msra.mxu0 0.0
    %770 = vmatprep.subr.mxu0 0.0
    %771 = vmatpush1.msra.mxu0 0.0
    %772 = vmatprep.subr.mxu0 0.0
    %773 = vmatpush1.msra.mxu0 0.0
    %774 = vmatprep.subr.mxu0 0.0
    %775 = vmatpush1.msra.mxu0 0.0
    %776 = vmatprep.subr.mxu0 0.0
    %777 = vmatpush1.msra.mxu0 0.0
    %778 = vmatprep.subr.mxu0 0.0
    %779 = vmatpush1.msra.mxu0 0.0
    %780 = vmatprep.subr.mxu0 0.0
    %781 = vmatpush1.msra.mxu0 0.0
    %782 = vmatprep.subr.mxu0 0.0
    %783 = vmatpush1.msra.mxu0 0.0
    %784 = vmatprep.subr.mxu0 0.0
    %785 = vmatpush1.msra.mxu0 0.0
    %786 = vmatprep.subr.mxu0 0.0
    %787 = vmatpush1.msra.mxu0 0.0
    %788 = vmatprep.subr.mxu0 0.0
    %789 = vmatpush1.msra.mxu0 0.0
    %790 = vmatprep.subr.mxu0 0.0
    %791 = vmatpush1.msra.mxu0 %v37
    %792 = vmatprep.subr.mxu0 0.0
    %793 = vmatpush1.msra.mxu0 %v36
    %794 = vmatprep.subr.mxu0 0.0
    %795 = vmatpush1.msra.mxu0 %v35
    %796 = vmatprep.subr.mxu0 0.0
    %797 = vmatpush1.msra.mxu0 %v34
    %798 = vmatprep.subr.mxu0 0.0
    %799 = vmatpush2.msra.mxu0 0.0
    %800 = vmatprep.subr.mxu0 0.0
    %801 = vmatpush2.msra.mxu0 0.0
    %802 = vmatprep.subr.mxu0 0.0
    %803 = vmatpush2.msra.mxu0 0.0
    %804 = vmatprep.subr.mxu0 0.0
    %805 = vmatpush2.msra.mxu0 0.0
    %806 = vmatprep.subr.mxu0 0.0
    %807 = vmatpush2.msra.mxu0 0.0
    %808 = vmatprep.subr.mxu0 0.0
    %809 = vmatpush2.msra.mxu0 0.0
    %810 = vmatprep.subr.mxu0 0.0
    %811 = vmatpush2.msra.mxu0 0.0
    %812 = vmatprep.subr.mxu0 0.0
    %813 = vmatpush2.msra.mxu0 0.0
    %814 = vmatprep.subr.mxu0 0.0
    %815 = vmatpush2.msra.mxu0 0.0
    %816 = vmatprep.subr.mxu0 0.0
    %817 = vmatpush2.msra.mxu0 0.0
    %818 = vmatprep.subr.mxu0 0.0
    %819 = vmatpush2.msra.mxu0 0.0
    %820 = vmatprep.subr.mxu0 0.0
    %821 = vmatpush2.msra.mxu0 0.0
    %822 = vmatprep.subr.mxu0 0.0
    %823 = vmatpush2.msra.mxu0 0.0
    %824 = vmatprep.subr.mxu0 0.0
    %825 = vmatpush2.msra.mxu0 0.0
    %826 = vmatprep.subr.mxu0 0.0
    %827 = vmatpush2.msra.mxu0 0.0
    %828 = vmatprep.subr.mxu0 0.0
    %829 = vmatpush2.msra.mxu0 0.0
    %830 = vmatprep.mubr.f32.mxu0 0.0
    %831 = vmatmul.mubr.f32.gmra.mxu0 %v764
    %v832 = vpop.f32.mrf.mxu0
    %v833 = vadd.f32 0.0, %v832
    %v834 = vpop.f32.mrf.mxu0
    %835 = vdwg.mxu0
    %v836 = vadd.f32 %v760, %v833
    %v837 = vxor.u32 %v836, 2147483648
    %v838 = vmul.f32 %v837, 1.442695
    %v839 = vpow.pop %v838
    %v840 = vadd.f32 %v839, 1.0
    %v841 = vrcp.pop %v840
    %v842 = vmul.f32 1.0, %v841
    %v843 = vtanh.pop %v836
    %v844 = vmul.f32 %v842, %v750
    %846 = vrot.lane.b32.xlu0 %v843, 64
    %v847 = vpop.permute.xlu0 %846
    %v849 = vmul.f32 %v842, %v847
    %851 = vrot.lane.b32.xlu0 %v849, 32
    %v852 = vpop.permute.xlu0 %851
    %v854 = vadd.f32 %v844, %v852
    %v855 = vtanh.pop %v854
    %857 = vrot.lane.b32.xlu0 %v855, 64
    %v858 = vpop.permute.xlu0 %857
    %v860 = vmul.f32 %v842, %v858
    %s861 = sadd.s32 %s39, 6
    %v862 = vstv %s861
    %vm863 = vcmp.lt.s32.totalorder %v862, %v38
    %v864 = vsel %vm863, 1, 0
    %865 = vset.pattern.permute.xlu0 0
    %866 = vperm.xlu0 %865, %v864
    %v867 = vpop.permute.xlu0 %866
    %vm868 = vcmp.eq.s32.totalorder %v867, 1
    %v869 = vsel %vm868, %v854, %v750
    %v870 = vsel %vm868, %v860, %v751
    %v871 = vsel %vm868, %v860, 0.0
    %873 = vrot.lane.b32.xlu0 %v871, 32
    %v874 = vpop.permute.xlu0 %873
    %s876 = scalar_lea.vmem [#allocation4], 48
    %877 = vst.msk [vmem:[%s876] sm:$0xff] %vm43, %v874
    %s878 = scalar_lea.vmem %s0, 56
    %v879 = vld [vmem:[%s878] sm:$0xff]
    %881 = vrot.lane.b32.xlu0 %v870, 32
    %v882 = vpop.permute.xlu0 %881
    %v883 = vsel %vm43, %v882, 0
    %885 = vmatprep.subr.mxu0 0.0
    %886 = vmatpush1.msra.mxu0 0.0
    %887 = vmatprep.subr.mxu0 0.0
    %888 = vmatpush1.msra.mxu0 0.0
    %889 = vmatprep.subr.mxu0 0.0
    %890 = vmatpush1.msra.mxu0 0.0
    %891 = vmatprep.subr.mxu0 0.0
    %892 = vmatpush1.msra.mxu0 0.0
    %893 = vmatprep.subr.mxu0 0.0
    %894 = vmatpush1.msra.mxu0 0.0
    %895 = vmatprep.subr.mxu0 0.0
    %896 = vmatpush1.msra.mxu0 0.0
    %897 = vmatprep.subr.mxu0 0.0
    %898 = vmatpush1.msra.mxu0 0.0
    %899 = vmatprep.subr.mxu0 0.0
    %900 = vmatpush1.msra.mxu0 0.0
    %901 = vmatprep.subr.mxu0 0.0
    %902 = vmatpush1.msra.mxu0 0.0
    %903 = vmatprep.subr.mxu0 0.0
    %904 = vmatpush1.msra.mxu0 0.0
    %905 = vmatprep.subr.mxu0 0.0
    %906 = vmatpush1.msra.mxu0 0.0
    %907 = vmatprep.subr.mxu0 0.0
    %908 = vmatpush1.msra.mxu0 0.0
    %909 = vmatprep.subr.mxu0 0.0
    %910 = vmatpush1.msra.mxu0 %v37
    %911 = vmatprep.subr.mxu0 0.0
    %912 = vmatpush1.msra.mxu0 %v36
    %913 = vmatprep.subr.mxu0 0.0
    %914 = vmatpush1.msra.mxu0 %v35
    %915 = vmatprep.subr.mxu0 0.0
    %916 = vmatpush1.msra.mxu0 %v34
    %917 = vmatprep.subr.mxu0 0.0
    %918 = vmatpush2.msra.mxu0 0.0
    %919 = vmatprep.subr.mxu0 0.0
    %920 = vmatpush2.msra.mxu0 0.0
    %921 = vmatprep.subr.mxu0 0.0
    %922 = vmatpush2.msra.mxu0 0.0
    %923 = vmatprep.subr.mxu0 0.0
    %924 = vmatpush2.msra.mxu0 0.0
    %925 = vmatprep.subr.mxu0 0.0
    %926 = vmatpush2.msra.mxu0 0.0
    %927 = vmatprep.subr.mxu0 0.0
    %928 = vmatpush2.msra.mxu0 0.0
    %929 = vmatprep.subr.mxu0 0.0
    %930 = vmatpush2.msra.mxu0 0.0
    %931 = vmatprep.subr.mxu0 0.0
    %932 = vmatpush2.msra.mxu0 0.0
    %933 = vmatprep.subr.mxu0 0.0
    %934 = vmatpush2.msra.mxu0 0.0
    %935 = vmatprep.subr.mxu0 0.0
    %936 = vmatpush2.msra.mxu0 0.0
    %937 = vmatprep.subr.mxu0 0.0
    %938 = vmatpush2.msra.mxu0 0.0
    %939 = vmatprep.subr.mxu0 0.0
    %940 = vmatpush2.msra.mxu0 0.0
    %941 = vmatprep.subr.mxu0 0.0
    %942 = vmatpush2.msra.mxu0 0.0
    %943 = vmatprep.subr.mxu0 0.0
    %944 = vmatpush2.msra.mxu0 0.0
    %945 = vmatprep.subr.mxu0 0.0
    %946 = vmatpush2.msra.mxu0 0.0
    %947 = vmatprep.subr.mxu0 0.0
    %948 = vmatpush2.msra.mxu0 0.0
    %949 = vmatprep.mubr.f32.mxu0 0.0
    %950 = vmatmul.mubr.f32.gmra.mxu0 %v883
    %v951 = vpop.f32.mrf.mxu0
    %v952 = vadd.f32 0.0, %v951
    %v953 = vpop.f32.mrf.mxu0
    %954 = vdwg.mxu0
    %v955 = vadd.f32 %v879, %v952
    %v956 = vxor.u32 %v955, 2147483648
    %v957 = vmul.f32 %v956, 1.442695
    %v958 = vpow.pop %v957
    %v959 = vadd.f32 %v958, 1.0
    %v960 = vrcp.pop %v959
    %v961 = vmul.f32 1.0, %v960
    %v962 = vtanh.pop %v955
    %v963 = vmul.f32 %v961, %v869
    %965 = vrot.lane.b32.xlu0 %v962, 64
    %v966 = vpop.permute.xlu0 %965
    %v968 = vmul.f32 %v961, %v966
    %970 = vrot.lane.b32.xlu0 %v968, 32
    %v971 = vpop.permute.xlu0 %970
    %v973 = vadd.f32 %v963, %v971
    %v974 = vtanh.pop %v973
    %976 = vrot.lane.b32.xlu0 %v974, 64
    %v977 = vpop.permute.xlu0 %976
    %v979 = vmul.f32 %v961, %v977
    %s980 = sadd.s32 %s39, 7
    %v981 = vstv %s980
    %vm982 = vcmp.lt.s32.totalorder %v981, %v38
    %v983 = vsel %vm982, 1, 0
    %984 = vset.pattern.permute.xlu0 0
    %985 = vperm.xlu0 %984, %v983
    %v986 = vpop.permute.xlu0 %985
    %vm987 = vcmp.eq.s32.totalorder %v986, 1
    %v988 = vsel %vm987, %v973, %v869
    %v989 = vsel %vm987, %v979, %v870
    %v990 = vsel %vm987, %v979, 0.0
    %992 = vrot.lane.b32.xlu0 %v990, 32
    %v993 = vpop.permute.xlu0 %992
    %s995 = scalar_lea.vmem [#allocation4], 56
    %996 = vst.msk [vmem:[%s995] sm:$0xff] %vm43, %v993
    %998 = vrot.lane.b32.xlu0 %v989, 32
    %v999 = vpop.permute.xlu0 %998
    %1001 = vst.msk [vmem:[#allocation2] sm:$0xff] %vm43, %v999
    %1003 = vrot.lane.b32.xlu0 %v988, 96
    %v1004 = vpop.permute.xlu0 %1003
    %1006 = vst.msk [vmem:[#allocation3] sm:$0xff] %vm43, %v1004
    // Predicated region
    $region26: #{_lstm_layer.3} parent=1 // pred_check
      %p1007 = pneg %p25
    $region27: #{_lstm_layer.3} parent=1 // pred_check_branch
      %1009 = sbr.rel (%p1007) target = $region29
    $region28: #{_lstm_layer.3} parent=1 // pred_region
      %1010 = vst.msk [vmem:[#allocation6] sm:$0xff] %vm43, %v999
      %1011 = vst.msk [vmem:[#allocation8] sm:$0xff] %vm43, %v1004
    $region29: #{_lstm_layer.3} parent=1 // pred_fallthru
      _
    // Predicated region
    $region30: #{_lstm_layer.3} parent=1 // pred_check
      _
    $region31: #{_lstm_layer.3} parent=1 // pred_check_branch
      %1013 = sbr.rel (0) target = $region33
    $region32: #{_lstm_layer.3} parent=1 // pred_region
      %s1015 = ssub.s32 1024, 1024
      %1016 = vsyncadd [#allocation5], %s1015
      %s1017 = sshll.u32 [#allocation4], 4
      %s1018 = int_to_ptr.vmem [resolvable:$true] %s1017
      %1023 = dma.vmem_to_hbm [thread:$0]  %s1018, 1024, %s5, [#allocation5], 128, 128, 8
    $region33: #{_lstm_layer.3} parent=1 // pred_fallthru
      _
    // Predicated region
    $region34: #{_lstm_layer.3} parent=1 // pred_check
      _
    $region35: #{_lstm_layer.3} parent=1 // pred_check_branch
      %1025 = sbr.rel (0) target = $region37
    $region36: #{_lstm_layer.3} parent=1 // pred_region
      %s1027 = ssub.s32 128, 128
      %1028 = vsyncadd [#allocation7], %s1027
      %s1030 = sshll.u32 [#allocation6], 4
      %s1031 = int_to_ptr.vmem [resolvable:$true] %s1030
      %1033 = dma.vmem_to_hbm [thread:$0]  %s1031, 128, %s6, [#allocation7]
    $region37: #{_lstm_layer.3} parent=1 // pred_fallthru
      _
    // Predicated region
    $region38: #{_lstm_layer.3} parent=1 // pred_check
      _
    $region39: #{_lstm_layer.3} parent=1 // pred_check_branch
      %1035 = sbr.rel (0) target = $region41
    $region40: #{_lstm_layer.3} parent=1 // pred_region
      %s1037 = ssub.s32 128, 128
      %1038 = vsyncadd [#allocation7], %s1037
      %s1040 = sshll.u32 [#allocation8], 4
      %s1041 = int_to_ptr.vmem [resolvable:$true] %s1040
      %1043 = dma.vmem_to_hbm [thread:$0]  %s1041, 128, %s7, [#allocation7]
    $region41: #{_lstm_layer.3} parent=1 // pred_fallthru
      _
    // Predicated region
    $region42: #{_lstm_layer.3} parent=1 // pred_check
      _
    $region43: #{_lstm_layer.3} parent=1 // pred_check_branch
      %1045 = sbr.rel (0) target = $region45
    $region44: #{_lstm_layer.3} parent=1 // pred_region
      %1046 = dma.done [#allocation5], 1024
    $region45: #{_lstm_layer.3} parent=1 // pred_fallthru
      _
    // Predicated region
    $region46: #{_lstm_layer.3} parent=1 // pred_check
      _
    $region47: #{_lstm_layer.3} parent=1 // pred_check_branch
      %1048 = sbr.rel (0) target = $region49
    $region48: #{_lstm_layer.3} parent=1 // pred_region
      %1049 = dma.done [#allocation7], 128
    $region49: #{_lstm_layer.3} parent=1 // pred_fallthru
      _
    // Predicated region
    $region50: #{_lstm_layer.3} parent=1 // pred_check
      _
    $region51: #{_lstm_layer.3} parent=1 // pred_check_branch
      %1051 = sbr.rel (0) target = $region53
    $region52: #{_lstm_layer.3} parent=1 // pred_region
      %1052 = dma.done [#allocation7], 128
    $region53: #{_lstm_layer.3} parent=1 // pred_fallthru
      _
    %1053 = vsyncpa [#allocation5], 1
    %1054 = vsyncpa [#allocation7], 1

</llo_original>
